<compile_context>
chip_gen: v6e
topology: v6e:2x2x1
jax: 0.10.0
libtpu: 0.0.40
codegen_flags: <defaults>
</compile_context>

<pallas_src>
import functools

import jax
import jax.numpy as jnp
from jax.experimental import pallas as pl
from jax.experimental.pallas import tpu as pltpu

HIDDEN_DIM = 256


def _round_up(x, m):
    return (x + m - 1) // m * m


def _elu(x):
    # PyTorch nn.ELU(alpha=1.0): x if x > 0 else exp(x) - 1, computed in f32.
    # (exp goes to the EUP slot; the select/sub are cheap VPU ops.)
    return jnp.where(x > 0, x, jnp.exp(x) - 1.0)


def _actor_kernel(x_ref,
                  w1_ref, b1_ref,
                  w2_ref, b2_ref,
                  w3_ref, b3_ref,
                  w4_ref, b4_ref,
                  out_ref):
    # x and all weights arrive as bf16; biases are f32; accumulate in f32.
    h = jnp.dot(x_ref[...], w1_ref[...],
                preferred_element_type=jnp.float32) + b1_ref[...]
    h = _elu(h)

    h = jnp.dot(h.astype(jnp.bfloat16), w2_ref[...],
                preferred_element_type=jnp.float32) + b2_ref[...]
    h = _elu(h)

    h = jnp.dot(h.astype(jnp.bfloat16), w3_ref[...],
                preferred_element_type=jnp.float32) + b3_ref[...]
    h = _elu(h)

    h = jnp.dot(h.astype(jnp.bfloat16), w4_ref[...],
                preferred_element_type=jnp.float32) + b4_ref[...]
    out_ref[...] = jnp.tanh(h).astype(out_ref.dtype)


@functools.partial(jax.jit, static_argnames=("batch_tile",))
def actor_forward(state, params, *, batch_tile=256):
    """Fused Actor MLP as a single Pallas kernel.

    state:  (B, state_dim) float32
    params: dict of w1,b1,...,w4,b4 with weights (in, out) and biases (1, out)
    """
    assert batch_tile % 8 == 0, "batch_tile must be a multiple of 8 (sublane)"
    B, state_dim = state.shape
    action_dim = params["w4"].shape[1]

    d_pad = _round_up(state_dim, 8)          # 28 -> 32: aligned K / x loads
    a_pad = _round_up(action_dim, 128)       # 8 -> 128: lane-dense output slab
    b_pad = _round_up(B, batch_tile)         # any batch size works

    # Zero-pad + cast MXU operands to bf16 (f32 accumulate inside the kernel).
    x_p = jnp.pad(state, ((0, b_pad - B), (0, d_pad - state_dim)))
    x_p = x_p.astype(jnp.bfloat16)

    w1 = jnp.pad(params["w1"], ((0, d_pad - state_dim), (0, 0))).astype(jnp.bfloat16)
    w2 = params["w2"].astype(jnp.bfloat16)
    w3 = params["w3"].astype(jnp.bfloat16)
    w4 = jnp.pad(params["w4"], ((0, 0), (0, a_pad - action_dim))).astype(jnp.bfloat16)
    b1 = params["b1"].astype(jnp.float32)
    b2 = params["b2"].astype(jnp.float32)
    b3 = params["b3"].astype(jnp.float32)
    b4 = jnp.pad(params["b4"], ((0, 0), (0, a_pad - action_dim))).astype(jnp.float32)

    grid = (b_pad // batch_tile,)

    def x_map(i):
        return (i, 0)

    def w_map(i):
        # Grid-invariant: weights/biases stay resident in VMEM across the grid.
        return (0, 0)

    weight_args = [w1, b1, w2, b2, w3, b3, w4, b4]
    weight_specs = [pl.BlockSpec(a.shape, w_map) for a in weight_args]

    # Advisory cost hint so XLA schedules this custom call sensibly.
    flops = 2 * b_pad * (d_pad * 512 + 512 * 256 + 256 * 256 + 256 * a_pad)
    transcendentals = b_pad * (512 + 256 + 256 + a_pad)
    bytes_accessed = (
        int(x_p.size) * 2
        + sum(int(a.size) * a.dtype.itemsize for a in weight_args)
        + b_pad * a_pad * 4)
    cost = pl.CostEstimate(flops=flops,
                           transcendentals=transcendentals,
                           bytes_accessed=bytes_accessed)

    out = pl.pallas_call(
        _actor_kernel,
        out_shape=jax.ShapeDtypeStruct((b_pad, a_pad), jnp.float32),
        grid_spec=pltpu.PrefetchScalarGridSpec(
            num_scalar_prefetch=0,
            grid=grid,
            in_specs=[pl.BlockSpec((batch_tile, d_pad), x_map)] + weight_specs,
            out_specs=pl.BlockSpec((batch_tile, a_pad), x_map),
        ),
        compiler_params=pltpu.CompilerParams(
            dimension_semantics=("parallel",),   # shards batch across v7x TCs
            vmem_limit_bytes=48 << 20,           # headroom for large batch tiles
        ),
        cost_estimate=cost,
    )(x_p, *weight_args)

    return out[:B, :action_dim]


def init_actor_params(key, state_dim, action_dim):
    """Deterministic init matching the shapes implied by Actor.__init__."""
    dims = [
        (state_dim, 2 * HIDDEN_DIM),
        (2 * HIDDEN_DIM, HIDDEN_DIM),
        (HIDDEN_DIM, HIDDEN_DIM),
        (HIDDEN_DIM, action_dim),
    ]
    params = {}
    for idx, (fan_in, fan_out) in enumerate(dims, start=1):
        key, wk, bk = jax.random.split(key, 3)
        bound = 1.0 / jnp.sqrt(jnp.float32(fan_in))  # PyTorch default uniform bound
        params[f"w{idx}"] = jax.random.uniform(
            wk, (fan_in, fan_out), jnp.float32, -bound, bound)
        params[f"b{idx}"] = jax.random.uniform(
            bk, (1, fan_out), jnp.float32, -bound, bound)
    return params


def actor_forward_ref_bf16(state, params):
    """Pure-JAX reference with the same bf16-operand / f32-accumulate math."""
    def dense(h, w, b):
        return jnp.dot(h.astype(jnp.bfloat16), w.astype(jnp.bfloat16),
                       preferred_element_type=jnp.float32) + b
    h = _elu(dense(state, params["w1"], params["b1"]))
    h = _elu(dense(h, params["w2"], params["b2"]))
    h = _elu(dense(h, params["w3"], params["b3"]))
    return jnp.tanh(dense(h, params["w4"], params["b4"]))


def actor_forward_ref_f32(state, params):
    """Full-precision reference (PyTorch-equivalent math)."""
    h = _elu(state @ params["w1"] + params["b1"])
    h = _elu(h @ params["w2"] + params["b2"])
    h = _elu(h @ params["w3"] + params["b3"])
    return jnp.tanh(h @ params["w4"] + params["b4"])


if __name__ == "__main__":
    # Ant-like sizes: state_dim=28, action_dim=8.
    # B=256 with batch_tile=128 -> grid of 2, so both v7x TensorCores get work.
    B, STATE_DIM, ACTION_DIM = 256, 28, 8

    key = jax.random.PRNGKey(0)
    key, pkey, skey = jax.random.split(key, 3)

    params = init_actor_params(pkey, STATE_DIM, ACTION_DIM)
    state = jax.random.normal(skey, (B, STATE_DIM), jnp.float32)

    out = actor_forward(state, params, batch_tile=128)
    out = jax.block_until_ready(out)
    assert out.shape == (B, ACTION_DIM), out.shape

    # Tight check against the matching bf16/f32-accumulate reference.
    ref_bf16 = actor_forward_ref_bf16(state, params)
    err = jnp.max(jnp.abs(out - ref_bf16))
    assert jnp.allclose(out, ref_bf16, atol=1e-4, rtol=1e-4), f"max abs err = {err}"

    # Loose sanity check against full-f32 (PyTorch-equivalent) math.
    ref_f32 = actor_forward_ref_f32(state, params)
    err32 = jnp.max(jnp.abs(out - ref_f32))
    assert jnp.allclose(out, ref_f32, atol=1e-1), f"max abs err vs f32 = {err32}"

    print("KERNEL_OK")
</pallas_src>

<mosaic_0001>
module attributes {stable_mosaic.version = 11 : i64} {
  func.func @_actor_kernel(%arg0: i32, %arg1: memref<128x32xbf16, #tpu.memory_space<vmem>>, %arg2: memref<32x512xbf16, #tpu.memory_space<vmem>>, %arg3: memref<1x512xf32, #tpu.memory_space<vmem>>, %arg4: memref<512x256xbf16, #tpu.memory_space<vmem>>, %arg5: memref<1x256xf32, #tpu.memory_space<vmem>>, %arg6: memref<256x256xbf16, #tpu.memory_space<vmem>>, %arg7: memref<1x256xf32, #tpu.memory_space<vmem>>, %arg8: memref<256x128xbf16, #tpu.memory_space<vmem>>, %arg9: memref<1x128xf32, #tpu.memory_space<vmem>>, %arg10: memref<128x128xf32, #tpu.memory_space<vmem>>) attributes {dimension_semantics = [#tpu.dimension_semantics<parallel>], iteration_bounds = array<i64: 2>, scalar_prefetch = 0 : i64, scratch_operands = 0 : i64, tpu.core_type = #tpu.core_type<tc>, window_params = [{transform_indices = @transform_0, window_bounds = array<i64: 128, 32>}, {pipeline_mode = #tpu.pipeline_mode<synchronous>, transform_indices = @transform_1, window_bounds = array<i64: 32, 512>}, {pipeline_mode = #tpu.pipeline_mode<synchronous>, transform_indices = @transform_2, window_bounds = array<i64: 1, 512>}, {pipeline_mode = #tpu.pipeline_mode<synchronous>, transform_indices = @transform_3, window_bounds = array<i64: 512, 256>}, {pipeline_mode = #tpu.pipeline_mode<synchronous>, transform_indices = @transform_4, window_bounds = array<i64: 1, 256>}, {pipeline_mode = #tpu.pipeline_mode<synchronous>, transform_indices = @transform_5, window_bounds = array<i64: 256, 256>}, {pipeline_mode = #tpu.pipeline_mode<synchronous>, transform_indices = @transform_6, window_bounds = array<i64: 1, 256>}, {pipeline_mode = #tpu.pipeline_mode<synchronous>, transform_indices = @transform_7, window_bounds = array<i64: 256, 128>}, {pipeline_mode = #tpu.pipeline_mode<synchronous>, transform_indices = @transform_8, window_bounds = array<i64: 1, 128>}, {transform_indices = @transform_9, window_bounds = array<i64: 128, 128>}]} {
    %c0 = arith.constant 0 : index
    %c0_0 = arith.constant 0 : index
    %0 = vector.load %arg1[%c0, %c0_0] : memref<128x32xbf16, #tpu.memory_space<vmem>>, vector<128x32xbf16>
    %c0_1 = arith.constant 0 : index
    %c0_2 = arith.constant 0 : index
    %1 = vector.load %arg2[%c0_1, %c0_2] : memref<32x512xbf16, #tpu.memory_space<vmem>>, vector<32x512xbf16>
    %cst = arith.constant dense<0.000000e+00> : vector<128x512xf32>
    %2 = tpu.matmul %0, %1, %cst {dimension_numbers = #tpu.dot_dimension_numbers<[1], [0], [0], [1], [0, 0, 1, 1], [], []>} : vector<128x32xbf16>, vector<32x512xbf16>, vector<128x512xf32> -> vector<128x512xf32>
    %c0_3 = arith.constant 0 : index
    %c0_4 = arith.constant 0 : index
    %3 = vector.load %arg3[%c0_3, %c0_4] : memref<1x512xf32, #tpu.memory_space<vmem>>, vector<1x512xf32>
    %4 = vector.broadcast %3 : vector<1x512xf32> to vector<128x512xf32>
    %5 = arith.addf %2, %4 : vector<128x512xf32>
    %cst_5 = arith.constant 0.000000e+00 : f32
    %6 = vector.broadcast %cst_5 : f32 to vector<128x512xf32>
    %7 = arith.cmpf ogt, %5, %6 : vector<128x512xf32>
    %8 = math.exp %5 : vector<128x512xf32>
    %cst_6 = arith.constant 1.000000e+00 : f32
    %9 = vector.broadcast %cst_6 : f32 to vector<128x512xf32>
    %10 = arith.subf %8, %9 : vector<128x512xf32>
    %11 = arith.select %7, %5, %10 : vector<128x512xi1>, vector<128x512xf32>
    %12 = arith.truncf %11 : vector<128x512xf32> to vector<128x512xbf16>
    %c0_7 = arith.constant 0 : index
    %c0_8 = arith.constant 0 : index
    %13 = vector.load %arg4[%c0_7, %c0_8] : memref<512x256xbf16, #tpu.memory_space<vmem>>, vector<512x256xbf16>
    %cst_9 = arith.constant dense<0.000000e+00> : vector<128x256xf32>
    %14 = tpu.matmul %12, %13, %cst_9 {dimension_numbers = #tpu.dot_dimension_numbers<[1], [0], [0], [1], [0, 0, 1, 1], [], []>} : vector<128x512xbf16>, vector<512x256xbf16>, vector<128x256xf32> -> vector<128x256xf32>
    %c0_10 = arith.constant 0 : index
    %c0_11 = arith.constant 0 : index
    %15 = vector.load %arg5[%c0_10, %c0_11] : memref<1x256xf32, #tpu.memory_space<vmem>>, vector<1x256xf32>
    %16 = vector.broadcast %15 : vector<1x256xf32> to vector<128x256xf32>
    %17 = arith.addf %14, %16 : vector<128x256xf32>
    %cst_12 = arith.constant 0.000000e+00 : f32
    %18 = vector.broadcast %cst_12 : f32 to vector<128x256xf32>
    %19 = arith.cmpf ogt, %17, %18 : vector<128x256xf32>
    %20 = math.exp %17 : vector<128x256xf32>
    %cst_13 = arith.constant 1.000000e+00 : f32
    %21 = vector.broadcast %cst_13 : f32 to vector<128x256xf32>
    %22 = arith.subf %20, %21 : vector<128x256xf32>
    %23 = arith.select %19, %17, %22 : vector<128x256xi1>, vector<128x256xf32>
    %24 = arith.truncf %23 : vector<128x256xf32> to vector<128x256xbf16>
    %c0_14 = arith.constant 0 : index
    %c0_15 = arith.constant 0 : index
    %25 = vector.load %arg6[%c0_14, %c0_15] : memref<256x256xbf16, #tpu.memory_space<vmem>>, vector<256x256xbf16>
    %cst_16 = arith.constant dense<0.000000e+00> : vector<128x256xf32>
    %26 = tpu.matmul %24, %25, %cst_16 {dimension_numbers = #tpu.dot_dimension_numbers<[1], [0], [0], [1], [0, 0, 1, 1], [], []>} : vector<128x256xbf16>, vector<256x256xbf16>, vector<128x256xf32> -> vector<128x256xf32>
    %c0_17 = arith.constant 0 : index
    %c0_18 = arith.constant 0 : index
    %27 = vector.load %arg7[%c0_17, %c0_18] : memref<1x256xf32, #tpu.memory_space<vmem>>, vector<1x256xf32>
    %28 = vector.broadcast %27 : vector<1x256xf32> to vector<128x256xf32>
    %29 = arith.addf %26, %28 : vector<128x256xf32>
    %cst_19 = arith.constant 0.000000e+00 : f32
    %30 = vector.broadcast %cst_19 : f32 to vector<128x256xf32>
    %31 = arith.cmpf ogt, %29, %30 : vector<128x256xf32>
    %32 = math.exp %29 : vector<128x256xf32>
    %cst_20 = arith.constant 1.000000e+00 : f32
    %33 = vector.broadcast %cst_20 : f32 to vector<128x256xf32>
    %34 = arith.subf %32, %33 : vector<128x256xf32>
    %35 = arith.select %31, %29, %34 : vector<128x256xi1>, vector<128x256xf32>
    %36 = arith.truncf %35 : vector<128x256xf32> to vector<128x256xbf16>
    %c0_21 = arith.constant 0 : index
    %c0_22 = arith.constant 0 : index
    %37 = vector.load %arg8[%c0_21, %c0_22] : memref<256x128xbf16, #tpu.memory_space<vmem>>, vector<256x128xbf16>
    %cst_23 = arith.constant dense<0.000000e+00> : vector<128x128xf32>
    %38 = tpu.matmul %36, %37, %cst_23 {dimension_numbers = #tpu.dot_dimension_numbers<[1], [0], [0], [1], [0, 0, 1, 1], [], []>} : vector<128x256xbf16>, vector<256x128xbf16>, vector<128x128xf32> -> vector<128x128xf32>
    %c0_24 = arith.constant 0 : index
    %c0_25 = arith.constant 0 : index
    %39 = vector.load %arg9[%c0_24, %c0_25] : memref<1x128xf32, #tpu.memory_space<vmem>>, vector<1x128xf32>
    %40 = vector.broadcast %39 : vector<1x128xf32> to vector<128x128xf32>
    %41 = arith.addf %38, %40 : vector<128x128xf32>
    %42 = math.tanh %41 : vector<128x128xf32>
    %c0_26 = arith.constant 0 : index
    %c0_27 = arith.constant 0 : index
    %43 = vector.load %arg10[%c0_26, %c0_27] : memref<128x128xf32, #tpu.memory_space<vmem>>, vector<128x128xf32>
    tpu.vector_store %arg10[%c0_26, %c0_27], %42 {strides = array<i32>} : memref<128x128xf32, #tpu.memory_space<vmem>>, vector<128x128xf32>,
    return
  }
  func.func @transform_0(%arg0: i32) -> (i32, i32) {
    %c0_i32 = arith.constant 0 : i32
    %c0_i32_0 = arith.constant 0 : i32
    return %arg0, %c0_i32 : i32, i32
  }
  func.func @transform_1(%arg0: i32) -> (i32, i32) {
    %c0_i32 = arith.constant 0 : i32
    %c0_i32_0 = arith.constant 0 : i32
    %c0_i32_1 = arith.constant 0 : i32
    return %c0_i32, %c0_i32_0 : i32, i32
  }
  func.func @transform_2(%arg0: i32) -> (i32, i32) {
    %c0_i32 = arith.constant 0 : i32
    %c0_i32_0 = arith.constant 0 : i32
    %c0_i32_1 = arith.constant 0 : i32
    return %c0_i32, %c0_i32_0 : i32, i32
  }
  func.func @transform_3(%arg0: i32) -> (i32, i32) {
    %c0_i32 = arith.constant 0 : i32
    %c0_i32_0 = arith.constant 0 : i32
    %c0_i32_1 = arith.constant 0 : i32
    return %c0_i32, %c0_i32_0 : i32, i32
  }
  func.func @transform_4(%arg0: i32) -> (i32, i32) {
    %c0_i32 = arith.constant 0 : i32
    %c0_i32_0 = arith.constant 0 : i32
    %c0_i32_1 = arith.constant 0 : i32
    return %c0_i32, %c0_i32_0 : i32, i32
  }
  func.func @transform_5(%arg0: i32) -> (i32, i32) {
    %c0_i32 = arith.constant 0 : i32
    %c0_i32_0 = arith.constant 0 : i32
    %c0_i32_1 = arith.constant 0 : i32
    return %c0_i32, %c0_i32_0 : i32, i32
  }
  func.func @transform_6(%arg0: i32) -> (i32, i32) {
    %c0_i32 = arith.constant 0 : i32
    %c0_i32_0 = arith.constant 0 : i32
    %c0_i32_1 = arith.constant 0 : i32
    return %c0_i32, %c0_i32_0 : i32, i32
  }
  func.func @transform_7(%arg0: i32) -> (i32, i32) {
    %c0_i32 = arith.constant 0 : i32
    %c0_i32_0 = arith.constant 0 : i32
    %c0_i32_1 = arith.constant 0 : i32
    return %c0_i32, %c0_i32_0 : i32, i32
  }
  func.func @transform_8(%arg0: i32) -> (i32, i32) {
    %c0_i32 = arith.constant 0 : i32
    %c0_i32_0 = arith.constant 0 : i32
    %c0_i32_1 = arith.constant 0 : i32
    return %c0_i32, %c0_i32_0 : i32, i32
  }
  func.func @transform_9(%arg0: i32) -> (i32, i32) {
    %c0_i32 = arith.constant 0 : i32
    %c0_i32_0 = arith.constant 0 : i32
    return %arg0, %c0_i32 : i32, i32
  }
}

</mosaic_0001>

<llo_original>
// kernel: actor_forward.1
$region0: #{actor_forward.1}
  #allocation0 [shape = 'u32[]', space=smem, size = 0x4, offset = 0x4, fixed_abs, tag = 'smem constant byte address 0x4 - core index']
  #allocation1 [shape = 'u32[144,128]{1,0:T(1,128)}', space=vmem, size = 0x12000, scoped, tag = 'internal scratch']
  %s0 = inlined_call_operand.vmem [shape: bf16[256,32], index: 0, kind: input, shape index: {}]
  %s1 = inlined_call_operand.vmem [shape: bf16[32,512], index: 1, kind: input, shape index: {}]
  %s2 = inlined_call_operand.vmem [shape: f32[1,512], index: 2, kind: input, shape index: {}]
  %s3 = inlined_call_operand.vmem [shape: bf16[512,256], index: 3, kind: input, shape index: {}]
  %s4 = inlined_call_operand.vmem [shape: f32[1,256], index: 4, kind: input, shape index: {}]
  %s5 = inlined_call_operand.vmem [shape: bf16[256,256], index: 5, kind: input, shape index: {}]
  %s6 = inlined_call_operand.vmem [shape: f32[1,256], index: 6, kind: input, shape index: {}]
  %s7 = inlined_call_operand.vmem [shape: bf16[256,128], index: 7, kind: input, shape index: {}]
  %s8 = inlined_call_operand.vmem [shape: f32[1,128], index: 8, kind: input, shape index: {}]
  %s9 = inlined_call_operand.vmem [shape: f32[256,128], index: 9, kind: output, shape index: {}]
  %s10 = sld [smem:[#allocation0]]
  $region69: #{actor_forward.1} parent=0
    _
  %s12 = ssub.s32 1, %s10
  %s13 = scalar_select 0, %s12, %s10
  loop: start=0, step=1, limit=4
  $region2: #{actor_forward.1} parent=0 // loop_pre_header
    _
  $region3: #{actor_forward.1} parent=0 // loop_header
    %s15 = sphi 0, %s19
    %p16 = scmp.ge.s32.totalorder %s15, 4
    %s25 = sphi 0, %s27
    %s28 = sphi 0, %s25
    %s29 = sphi 0, %s28
    %s45 = sphi 0, %s29
    %s49 = sphi 0, %s49
    %s51 = sphi 0, %s49
    %s52 = sphi 0, %s51
    %s66 = sphi 0, %s52
    %s70 = sphi 0, %s70
    %s72 = sphi 0, %s70
    %s73 = sphi 0, %s72
    %s87 = sphi 0, %s73
    %s91 = sphi 0, %s91
    %s93 = sphi 0, %s91
    %s94 = sphi 0, %s93
    %s108 = sphi 0, %s94
    %s112 = sphi 0, %s112
    %s114 = sphi 0, %s112
    %s115 = sphi 0, %s114
    %s129 = sphi 0, %s115
    %s133 = sphi 0, %s133
    %s135 = sphi 0, %s133
    %s136 = sphi 0, %s135
    %s150 = sphi 0, %s136
    %s154 = sphi 0, %s154
    %s156 = sphi 0, %s154
    %s157 = sphi 0, %s156
    %s171 = sphi 0, %s157
    %s175 = sphi 0, %s175
    %s177 = sphi 0, %s175
    %s178 = sphi 0, %s177
    %s192 = sphi 0, %s178
    %s196 = sphi 0, %s196
    %s198 = sphi 0, %s196
    %s199 = sphi 0, %s198
    %s213 = sphi 0, %s199
    %s219 = sphi 0, %s221
    %s222 = sphi 0, %s219
    %s223 = sphi 0, %s222
    %s239 = sphi 0, %s223
  $region4: #{actor_forward.1} parent=0 // loop_header_branch
    %18 = sbr.rel (%p16) target = $region8
  $region5: #{actor_forward.1} parent=0 // loop_body
    %s20 = ssub.s32 %s15, 1
    %s21 = ssub.s32 %s15, 2
    %s22 = sadd.s32 %s15, 1
    %s23 = ssub.s32 %s15, %s22
    %p24 = scmp.eq.s32.totalorder %s23, 0
    %s26 = sadd.s32 %s25, 1
    %s27 = scalar_select %p24, %s25, %s26
    %p30 = pneg %p24
    %p31 = scmp.eq.s32.totalorder %s15, 1
    %p32 = por %p30, %p31
    %p33 = scmp.ne.s32.totalorder %s25, %s28
    %p34 = scmp.eq.s32.totalorder %s15, 0
    %p35 = por %p33, %p34
    %p36 = scmp.ne.s32.totalorder %s25, %s28
    %p37 = scmp.eq.s32.totalorder %s20, 1
    %p38 = por %p36, %p37
    %p39 = scmp.ne.s32.totalorder %s28, %s29
    %p40 = scmp.eq.s32.totalorder %s20, 0
    %p41 = por %p39, %p40
    %p42 = scmp.ne.s32.totalorder %s28, %s29
    %p43 = scmp.eq.s32.totalorder %s21, 1
    %p44 = por %p42, %p43
    %p46 = scmp.ne.s32.totalorder %s29, %s45
    %p47 = scmp.eq.s32.totalorder %s21, 0
    %p48 = por %p46, %p47
    %s50 = sadd.s32 %s49, 1
    %p53 = scmp.eq.s32.totalorder %s15, 1
    %p54 = scmp.ne.s32.totalorder %s49, %s51
    %p55 = scmp.eq.s32.totalorder %s15, 0
    %p56 = por %p54, %p55
    %p57 = scmp.ne.s32.totalorder %s49, %s51
    %p58 = scmp.eq.s32.totalorder %s20, 1
    %p59 = por %p57, %p58
    %p60 = scmp.ne.s32.totalorder %s51, %s52
    %p61 = scmp.eq.s32.totalorder %s20, 0
    %p62 = por %p60, %p61
    %p63 = scmp.ne.s32.totalorder %s51, %s52
    %p64 = scmp.eq.s32.totalorder %s21, 1
    %p65 = por %p63, %p64
    %p67 = scmp.ne.s32.totalorder %s52, %s66
    %p68 = scmp.eq.s32.totalorder %s21, 0
    %p69 = por %p67, %p68
    %s71 = sadd.s32 %s70, 1
    %p74 = scmp.eq.s32.totalorder %s15, 1
    %p75 = scmp.ne.s32.totalorder %s70, %s72
    %p76 = scmp.eq.s32.totalorder %s15, 0
    %p77 = por %p75, %p76
    %p78 = scmp.ne.s32.totalorder %s70, %s72
    %p79 = scmp.eq.s32.totalorder %s20, 1
    %p80 = por %p78, %p79
    %p81 = scmp.ne.s32.totalorder %s72, %s73
    %p82 = scmp.eq.s32.totalorder %s20, 0
    %p83 = por %p81, %p82
    %p84 = scmp.ne.s32.totalorder %s72, %s73
    %p85 = scmp.eq.s32.totalorder %s21, 1
    %p86 = por %p84, %p85
    %p88 = scmp.ne.s32.totalorder %s73, %s87
    %p89 = scmp.eq.s32.totalorder %s21, 0
    %p90 = por %p88, %p89
    %s92 = sadd.s32 %s91, 1
    %p95 = scmp.eq.s32.totalorder %s15, 1
    %p96 = scmp.ne.s32.totalorder %s91, %s93
    %p97 = scmp.eq.s32.totalorder %s15, 0
    %p98 = por %p96, %p97
    %p99 = scmp.ne.s32.totalorder %s91, %s93
    %p100 = scmp.eq.s32.totalorder %s20, 1
    %p101 = por %p99, %p100
    %p102 = scmp.ne.s32.totalorder %s93, %s94
    %p103 = scmp.eq.s32.totalorder %s20, 0
    %p104 = por %p102, %p103
    %p105 = scmp.ne.s32.totalorder %s93, %s94
    %p106 = scmp.eq.s32.totalorder %s21, 1
    %p107 = por %p105, %p106
    %p109 = scmp.ne.s32.totalorder %s94, %s108
    %p110 = scmp.eq.s32.totalorder %s21, 0
    %p111 = por %p109, %p110
    %s113 = sadd.s32 %s112, 1
    %p116 = scmp.eq.s32.totalorder %s15, 1
    %p117 = scmp.ne.s32.totalorder %s112, %s114
    %p118 = scmp.eq.s32.totalorder %s15, 0
    %p119 = por %p117, %p118
    %p120 = scmp.ne.s32.totalorder %s112, %s114
    %p121 = scmp.eq.s32.totalorder %s20, 1
    %p122 = por %p120, %p121
    %p123 = scmp.ne.s32.totalorder %s114, %s115
    %p124 = scmp.eq.s32.totalorder %s20, 0
    %p125 = por %p123, %p124
    %p126 = scmp.ne.s32.totalorder %s114, %s115
    %p127 = scmp.eq.s32.totalorder %s21, 1
    %p128 = por %p126, %p127
    %p130 = scmp.ne.s32.totalorder %s115, %s129
    %p131 = scmp.eq.s32.totalorder %s21, 0
    %p132 = por %p130, %p131
    %s134 = sadd.s32 %s133, 1
    %p137 = scmp.eq.s32.totalorder %s15, 1
    %p138 = scmp.ne.s32.totalorder %s133, %s135
    %p139 = scmp.eq.s32.totalorder %s15, 0
    %p140 = por %p138, %p139
    %p141 = scmp.ne.s32.totalorder %s133, %s135
    %p142 = scmp.eq.s32.totalorder %s20, 1
    %p143 = por %p141, %p142
    %p144 = scmp.ne.s32.totalorder %s135, %s136
    %p145 = scmp.eq.s32.totalorder %s20, 0
    %p146 = por %p144, %p145
    %p147 = scmp.ne.s32.totalorder %s135, %s136
    %p148 = scmp.eq.s32.totalorder %s21, 1
    %p149 = por %p147, %p148
    %p151 = scmp.ne.s32.totalorder %s136, %s150
    %p152 = scmp.eq.s32.totalorder %s21, 0
    %p153 = por %p151, %p152
    %s155 = sadd.s32 %s154, 1
    %p158 = scmp.eq.s32.totalorder %s15, 1
    %p159 = scmp.ne.s32.totalorder %s154, %s156
    %p160 = scmp.eq.s32.totalorder %s15, 0
    %p161 = por %p159, %p160
    %p162 = scmp.ne.s32.totalorder %s154, %s156
    %p163 = scmp.eq.s32.totalorder %s20, 1
    %p164 = por %p162, %p163
    %p165 = scmp.ne.s32.totalorder %s156, %s157
    %p166 = scmp.eq.s32.totalorder %s20, 0
    %p167 = por %p165, %p166
    %p168 = scmp.ne.s32.totalorder %s156, %s157
    %p169 = scmp.eq.s32.totalorder %s21, 1
    %p170 = por %p168, %p169
    %p172 = scmp.ne.s32.totalorder %s157, %s171
    %p173 = scmp.eq.s32.totalorder %s21, 0
    %p174 = por %p172, %p173
    %s176 = sadd.s32 %s175, 1
    %p179 = scmp.eq.s32.totalorder %s15, 1
    %p180 = scmp.ne.s32.totalorder %s175, %s177
    %p181 = scmp.eq.s32.totalorder %s15, 0
    %p182 = por %p180, %p181
    %p183 = scmp.ne.s32.totalorder %s175, %s177
    %p184 = scmp.eq.s32.totalorder %s20, 1
    %p185 = por %p183, %p184
    %p186 = scmp.ne.s32.totalorder %s177, %s178
    %p187 = scmp.eq.s32.totalorder %s20, 0
    %p188 = por %p186, %p187
    %p189 = scmp.ne.s32.totalorder %s177, %s178
    %p190 = scmp.eq.s32.totalorder %s21, 1
    %p191 = por %p189, %p190
    %p193 = scmp.ne.s32.totalorder %s178, %s192
    %p194 = scmp.eq.s32.totalorder %s21, 0
    %p195 = por %p193, %p194
    %s197 = sadd.s32 %s196, 1
    %p200 = scmp.eq.s32.totalorder %s15, 1
    %p201 = scmp.ne.s32.totalorder %s196, %s198
    %p202 = scmp.eq.s32.totalorder %s15, 0
    %p203 = por %p201, %p202
    %p204 = scmp.ne.s32.totalorder %s196, %s198
    %p205 = scmp.eq.s32.totalorder %s20, 1
    %p206 = por %p204, %p205
    %p207 = scmp.ne.s32.totalorder %s198, %s199
    %p208 = scmp.eq.s32.totalorder %s20, 0
    %p209 = por %p207, %p208
    %p210 = scmp.ne.s32.totalorder %s198, %s199
    %p211 = scmp.eq.s32.totalorder %s21, 1
    %p212 = por %p210, %p211
    %p214 = scmp.ne.s32.totalorder %s199, %s213
    %p215 = scmp.eq.s32.totalorder %s21, 0
    %p216 = por %p214, %p215
    %s217 = ssub.s32 %s15, %s22
    %p218 = scmp.eq.s32.totalorder %s217, 0
    %s220 = sadd.s32 %s219, 1
    %s221 = scalar_select %p218, %s219, %s220
    %p224 = pneg %p218
    %p225 = scmp.eq.s32.totalorder %s15, 1
    %p226 = por %p224, %p225
    %p227 = scmp.ne.s32.totalorder %s219, %s222
    %p228 = scmp.eq.s32.totalorder %s15, 0
    %p229 = por %p227, %p228
    %p230 = scmp.ne.s32.totalorder %s219, %s222
    %p231 = scmp.eq.s32.totalorder %s20, 1
    %p232 = por %p230, %p231
    %p233 = scmp.ne.s32.totalorder %s222, %s223
    %p234 = scmp.eq.s32.totalorder %s20, 0
    %p235 = por %p233, %p234
    %p236 = scmp.ne.s32.totalorder %s222, %s223
    %p237 = scmp.eq.s32.totalorder %s21, 1
    %p238 = por %p236, %p237
    %p240 = scmp.ne.s32.totalorder %s223, %s239
    %p241 = scmp.eq.s32.totalorder %s21, 0
    %p242 = por %p240, %p241
    %p243 = scmp.le.s32.totalorder 1, %s15
    %p244 = scmp.lt.s32.totalorder %s15, 3
    %p245 = pnand %p243, %p244
    %p246 = pneg %p245
    // Predicated region
    $region9: #{actor_forward.1} parent=5 // pred_check
      _
    $region10: #{actor_forward.1} parent=5 // pred_check_branch
      %248 = sbr.rel (%p245) target = $region12
    $region11: #{actor_forward.1} parent=5 // pred_region
      %s249 = ssub.s32 %s15, 1
      // Predicated region
      $region13: #{actor_forward.1} parent=11 // pred_check
        %p250 = pneg %p62
      $region14: #{actor_forward.1} parent=11 // pred_check_branch
        %252 = sbr.rel (%p250) target = $region16
      $region15: #{actor_forward.1} parent=11 // pred_region
        _
      $region16: #{actor_forward.1} parent=11 // pred_fallthru
        _
      // Predicated region
      $region17: #{actor_forward.1} parent=11 // pred_check
        %p253 = pneg %p83
      $region18: #{actor_forward.1} parent=11 // pred_check_branch
        %255 = sbr.rel (%p253) target = $region20
      $region19: #{actor_forward.1} parent=11 // pred_region
        _
      $region20: #{actor_forward.1} parent=11 // pred_fallthru
        _
      // Predicated region
      $region21: #{actor_forward.1} parent=11 // pred_check
        %p256 = pneg %p104
      $region22: #{actor_forward.1} parent=11 // pred_check_branch
        %258 = sbr.rel (%p256) target = $region24
      $region23: #{actor_forward.1} parent=11 // pred_region
        _
      $region24: #{actor_forward.1} parent=11 // pred_fallthru
        _
      // Predicated region
      $region25: #{actor_forward.1} parent=11 // pred_check
        %p259 = pneg %p125
      $region26: #{actor_forward.1} parent=11 // pred_check_branch
        %261 = sbr.rel (%p259) target = $region28
      $region27: #{actor_forward.1} parent=11 // pred_region
        _
      $region28: #{actor_forward.1} parent=11 // pred_fallthru
        _
      // Predicated region
      $region29: #{actor_forward.1} parent=11 // pred_check
        %p262 = pneg %p146
      $region30: #{actor_forward.1} parent=11 // pred_check_branch
        %264 = sbr.rel (%p262) target = $region32
      $region31: #{actor_forward.1} parent=11 // pred_region
        _
      $region32: #{actor_forward.1} parent=11 // pred_fallthru
        _
      // Predicated region
      $region33: #{actor_forward.1} parent=11 // pred_check
        %p265 = pneg %p167
      $region34: #{actor_forward.1} parent=11 // pred_check_branch
        %267 = sbr.rel (%p265) target = $region36
      $region35: #{actor_forward.1} parent=11 // pred_region
        _
      $region36: #{actor_forward.1} parent=11 // pred_fallthru
        _
      // Predicated region
      $region37: #{actor_forward.1} parent=11 // pred_check
        %p268 = pneg %p188
      $region38: #{actor_forward.1} parent=11 // pred_check_branch
        %270 = sbr.rel (%p268) target = $region40
      $region39: #{actor_forward.1} parent=11 // pred_region
        _
      $region40: #{actor_forward.1} parent=11 // pred_fallthru
        _
      // Predicated region
      $region41: #{actor_forward.1} parent=11 // pred_check
        %p271 = pneg %p209
      $region42: #{actor_forward.1} parent=11 // pred_check_branch
        %273 = sbr.rel (%p271) target = $region44
      $region43: #{actor_forward.1} parent=11 // pred_region
        _
      $region44: #{actor_forward.1} parent=11 // pred_fallthru
        _
    $region12: #{actor_forward.1} parent=5 // pred_fallthru
      _
    %p274 = scmp.lt.s32.totalorder %s15, 2
    // Predicated region
    $region45: #{actor_forward.1} parent=5 // pred_check
      %p275 = pneg %p274
    $region46: #{actor_forward.1} parent=5 // pred_check_branch
      %277 = sbr.rel (%p275) target = $region48
    $region47: #{actor_forward.1} parent=5 // pred_region
      // Predicated region
      $region49: #{actor_forward.1} parent=47 // pred_check
        %p278 = pneg %p35
      $region50: #{actor_forward.1} parent=47 // pred_check_branch
        %280 = sbr.rel (%p278) target = $region52
      $region51: #{actor_forward.1} parent=47 // pred_region
        %s281 = smul.u32 16, %s15
        %p282 = scmp.lt.s32.totalorder %s281, 31
        %s283 = scalar_select %p282, %s281, 31
        %s284 = smul.addr %s283, 4
        %s285 = scalar_lea.vmem %s0, %s284
        %s286 = smul.u32 16, %s15
      $region52: #{actor_forward.1} parent=47 // pred_fallthru
        _
    $region48: #{actor_forward.1} parent=5 // pred_fallthru
      _
    %p287 = scmp.le.s32.totalorder 1, %s15
    %p288 = scmp.lt.s32.totalorder %s15, 3
    %p289 = pnand %p287, %p288
    %p290 = pneg %p289
    // Predicated region
    $region53: #{actor_forward.1} parent=5 // pred_check
      _
    $region54: #{actor_forward.1} parent=5 // pred_check_branch
      %292 = sbr.rel (%p289) target = $region56
    $region55: #{actor_forward.1} parent=5 // pred_region
      %s293 = ssub.s32 %s15, 1
      %s294 = smul.u32 16, %s20
      %p295 = scmp.lt.s32.totalorder %s294, 31
      %s296 = scalar_select %p295, %s294, 31
      %s297 = smul.addr %s296, 4
      %s298 = scalar_lea.vmem %s0, %s297
      %p299 = pneg %p41
      %p300 = pneg %p38
      %p301 = pneg %p62
      %p302 = pneg %p59
      %p303 = pneg %p83
      %p304 = pneg %p80
      %p305 = pneg %p104
      %p306 = pneg %p101
      %p307 = pneg %p125
      %p308 = pneg %p122
      %p309 = pneg %p146
      %p310 = pneg %p143
      %p311 = pneg %p167
      %p312 = pneg %p164
      %p313 = pneg %p188
      %p314 = pneg %p185
      %p315 = pneg %p209
      %p316 = pneg %p206
      %p317 = pneg %p235
      %p318 = pneg %p232
      %s319 = smul.u32 16, %s20
      %p320 = scmp.lt.s32.totalorder %s319, 31
      %s321 = scalar_select %p320, %s319, 31
      %s322 = smul.addr %s321, 8
      %s323 = scalar_lea.vmem %s9, %s322
      %s324 = smul.u32 16, %s20
      %p325 = scmp.lt.s32.totalorder %s324, 31
      %s326 = scalar_select %p325, %s324, 31
      %s327 = smul.addr %s326, 4
      %s328 = scalar_lea.vmem %s0, %s327
      %s329 = smul.u32 16, %s20
      %s330 = smul.u32 16, %s20
      %p331 = scmp.lt.s32.totalorder %s330, 31
      %s332 = scalar_select %p331, %s330, 31
      %s333 = smul.addr %s332, 8
      %s334 = scalar_lea.vmem %s9, %s333
      %s335 = smul.u32 16, %s20
      %v337 = vld [vmem:[%s328] sm:$0xf]
      %v338 = vld [vmem:[%s328 + $0x4] sm:$0xf]
      %v339 = vld [vmem:[%s328 + $0x8] sm:$0xf]
      %v340 = vld [vmem:[%s328 + $0xc] sm:$0xf]
      %v341 = vld [vmem:[%s328 + $0x10] sm:$0xf]
      %v342 = vld [vmem:[%s328 + $0x14] sm:$0xf]
      %v343 = vld [vmem:[%s328 + $0x18] sm:$0xf]
      %v344 = vld [vmem:[%s328 + $0x1c] sm:$0xf]
      %v345 = vld [vmem:[%s328 + $0x20] sm:$0xf]
      %v346 = vld [vmem:[%s328 + $0x24] sm:$0xf]
      %v347 = vld [vmem:[%s328 + $0x28] sm:$0xf]
      %v348 = vld [vmem:[%s328 + $0x2c] sm:$0xf]
      %v349 = vld [vmem:[%s328 + $0x30] sm:$0xf]
      %v350 = vld [vmem:[%s328 + $0x34] sm:$0xf]
      %v351 = vld [vmem:[%s328 + $0x38] sm:$0xf]
      %v352 = vld [vmem:[%s328 + $0x3c] sm:$0xf]
      %v353 = vld [vmem:[%s1] sm:$0xff]
      %v354 = vld [vmem:[%s1 + $0x8] sm:$0xff]
      %v355 = vld [vmem:[%s1 + $0x10] sm:$0xff]
      %v356 = vld [vmem:[%s1 + $0x18] sm:$0xff]
      %v357 = vld [vmem:[%s1 + $0x20] sm:$0xff]
      %v358 = vld [vmem:[%s1 + $0x28] sm:$0xff]
      %v359 = vld [vmem:[%s1 + $0x30] sm:$0xff]
      %v360 = vld [vmem:[%s1 + $0x38] sm:$0xff]
      %v361 = vld [vmem:[%s2] sm:$0xf]
      %v363 = vlaneseq
      %v364 = vshrl.u32 %v363, 7
      %v365 = vsub.s32 0, %v364
      %v366 = vrot.slane %v361, %v365
      %v367 = vlaneseq
      %v368 = vshrl.u32 %v367, 7
      %v369 = vsub.s32 1, %v368
      %v370 = vrot.slane %v361, %v369
      %v371 = vlaneseq
      %v372 = vshrl.u32 %v371, 7
      %v373 = vsub.s32 2, %v372
      %v374 = vrot.slane %v361, %v373
      %v375 = vlaneseq
      %v376 = vshrl.u32 %v375, 7
      %v377 = vsub.s32 3, %v376
      %v378 = vrot.slane %v361, %v377
      %v399 = vunpack.c.l.b16 %v337
      %v400 = vunpack.c.l.b16 %v338
      %v401 = vunpack.c.l.b16 %v339
      %v402 = vunpack.c.l.b16 %v340
      %v403 = vunpack.c.l.b16 %v341
      %v404 = vunpack.c.l.b16 %v342
      %v405 = vunpack.c.l.b16 %v343
      %v406 = vunpack.c.l.b16 %v344
      %v407 = vunpack.c.l.b16 %v345
      %v408 = vunpack.c.l.b16 %v346
      %v409 = vunpack.c.l.b16 %v347
      %v410 = vunpack.c.l.b16 %v348
      %v411 = vunpack.c.l.b16 %v349
      %v412 = vunpack.c.l.b16 %v350
      %v413 = vunpack.c.l.b16 %v351
      %v414 = vunpack.c.l.b16 %v352
      %v415 = vpack.c.b16 %v400, %v399
      %v416 = vpack.c.b16 %v402, %v401
      %v417 = vpack.c.b16 %v404, %v403
      %v418 = vpack.c.b16 %v406, %v405
      %v419 = vpack.c.b16 %v408, %v407
      %v420 = vpack.c.b16 %v410, %v409
      %v421 = vpack.c.b16 %v412, %v411
      %v422 = vpack.c.b16 %v414, %v413
      %v431 = vunpack.c.l.b16 %v353
      %v432 = vunpack.c.h.b16 %v353
      %v433 = vunpack.c.l.b16 %v354
      %v434 = vunpack.c.h.b16 %v354
      %v435 = vunpack.c.l.b16 %v355
      %v436 = vunpack.c.h.b16 %v355
      %v437 = vunpack.c.l.b16 %v356
      %v438 = vunpack.c.h.b16 %v356
      %v439 = vunpack.c.l.b16 %v357
      %v440 = vunpack.c.h.b16 %v357
      %v441 = vunpack.c.l.b16 %v358
      %v442 = vunpack.c.h.b16 %v358
      %v443 = vunpack.c.l.b16 %v359
      %v444 = vunpack.c.h.b16 %v359
      %v445 = vunpack.c.l.b16 %v360
      %v446 = vunpack.c.h.b16 %v360
      %v447 = vpack.c.b16 %v435, %v431
      %v448 = vpack.c.b16 %v436, %v432
      %v449 = vpack.c.b16 %v437, %v433
      %v450 = vpack.c.b16 %v438, %v434
      %v451 = vpack.c.b16 %v443, %v439
      %v452 = vpack.c.b16 %v444, %v440
      %v453 = vpack.c.b16 %v445, %v441
      %v454 = vpack.c.b16 %v446, %v442
      %vm463 = vcmask 261120
      %v465 = vsel %vm463, %v415, 0
      %v468 = vsel %vm463, %v416, 0
      %v471 = vsel %vm463, %v417, 0
      %v474 = vsel %vm463, %v418, 0
      %v477 = vsel %vm463, %v419, 0
      %v480 = vsel %vm463, %v420, 0
      %v483 = vsel %vm463, %v421, 0
      %v486 = vsel %vm463, %v422, 0
      %488 = vmatprep.subr.bf16.mxu0 0
      %489 = vmatpush1.bf16.msra.mxu0 0
      %490 = vmatprep.subr.bf16.mxu0 0
      %491 = vmatpush1.bf16.msra.mxu0 0
      %492 = vmatprep.subr.bf16.mxu0 0
      %493 = vmatpush1.bf16.msra.mxu0 0
      %494 = vmatprep.subr.bf16.mxu0 0
      %495 = vmatpush1.bf16.msra.mxu0 0
      %496 = vmatprep.subr.bf16.mxu0 0
      %497 = vmatpush1.bf16.msra.mxu0 0
      %498 = vmatprep.subr.bf16.mxu0 0
      %499 = vmatpush1.bf16.msra.mxu0 0
      %500 = vmatprep.subr.bf16.mxu0 %v452
      %501 = vmatpush1.bf16.msra.mxu0 %v451
      %502 = vmatprep.subr.bf16.mxu0 %v448
      %503 = vmatpush1.bf16.msra.mxu0 %v447
      %504 = vmatprep.subr.bf16.mxu0 0
      %505 = vmatpush2.bf16.msra.mxu0 0
      %506 = vmatprep.subr.bf16.mxu0 0
      %507 = vmatpush2.bf16.msra.mxu0 0
      %508 = vmatprep.subr.bf16.mxu0 0
      %509 = vmatpush2.bf16.msra.mxu0 0
      %510 = vmatprep.subr.bf16.mxu0 0
      %511 = vmatpush2.bf16.msra.mxu0 0
      %512 = vmatprep.subr.bf16.mxu0 0
      %513 = vmatpush2.bf16.msra.mxu0 0
      %514 = vmatprep.subr.bf16.mxu0 0
      %515 = vmatpush2.bf16.msra.mxu0 0
      %516 = vmatprep.subr.bf16.mxu0 0
      %517 = vmatpush2.bf16.msra.mxu0 0
      %518 = vmatprep.subr.bf16.mxu0 0
      %519 = vmatpush2.bf16.msra.mxu0 0
      %520 = vmatprep.mubr.bf16.mxu0 0
      %521 = vmatmul.mubr.bf16.gmra.mxu0 %v465
      %v522 = vpop.f32.mrf.mxu0
      %v523 = vadd.f32 %v366, %v522
      %v524 = vpop.f32.mrf.mxu0
      %v525 = vadd.f32 %v370, %v524
      %v526 = vpop.f32.mrf.mxu0
      %v527 = vadd.f32 %v366, %v526
      %v528 = vpop.f32.mrf.mxu0
      %v529 = vadd.f32 %v370, %v528
      %530 = vmatprep.mubr.bf16.mxu0 0
      %531 = vmatmul.mubr.bf16.gmra.mxu0 %v468
      %v532 = vpop.f32.mrf.mxu0
      %v533 = vadd.f32 %v366, %v532
      %v534 = vpop.f32.mrf.mxu0
      %v535 = vadd.f32 %v370, %v534
      %v536 = vpop.f32.mrf.mxu0
      %v537 = vadd.f32 %v366, %v536
      %v538 = vpop.f32.mrf.mxu0
      %v539 = vadd.f32 %v370, %v538
      %540 = vmatprep.mubr.bf16.mxu0 0
      %541 = vmatmul.mubr.bf16.gmra.mxu0 %v471
      %v542 = vpop.f32.mrf.mxu0
      %v543 = vadd.f32 %v366, %v542
      %v544 = vpop.f32.mrf.mxu0
      %v545 = vadd.f32 %v370, %v544
      %v546 = vpop.f32.mrf.mxu0
      %v547 = vadd.f32 %v366, %v546
      %v548 = vpop.f32.mrf.mxu0
      %v549 = vadd.f32 %v370, %v548
      %550 = vmatprep.mubr.bf16.mxu0 0
      %551 = vmatmul.mubr.bf16.gmra.mxu0 %v474
      %v552 = vpop.f32.mrf.mxu0
      %v553 = vadd.f32 %v366, %v552
      %v554 = vpop.f32.mrf.mxu0
      %v555 = vadd.f32 %v370, %v554
      %v556 = vpop.f32.mrf.mxu0
      %v557 = vadd.f32 %v366, %v556
      %v558 = vpop.f32.mrf.mxu0
      %v559 = vadd.f32 %v370, %v558
      %560 = vmatprep.mubr.bf16.mxu0 0
      %561 = vmatmul.mubr.bf16.gmra.mxu0 %v477
      %v562 = vpop.f32.mrf.mxu0
      %v563 = vadd.f32 %v366, %v562
      %v564 = vpop.f32.mrf.mxu0
      %v565 = vadd.f32 %v370, %v564
      %v566 = vpop.f32.mrf.mxu0
      %v567 = vadd.f32 %v366, %v566
      %v568 = vpop.f32.mrf.mxu0
      %v569 = vadd.f32 %v370, %v568
      %570 = vmatprep.mubr.bf16.mxu0 0
      %571 = vmatmul.mubr.bf16.gmra.mxu0 %v480
      %v572 = vpop.f32.mrf.mxu0
      %v573 = vadd.f32 %v366, %v572
      %v574 = vpop.f32.mrf.mxu0
      %v575 = vadd.f32 %v370, %v574
      %v576 = vpop.f32.mrf.mxu0
      %v577 = vadd.f32 %v366, %v576
      %v578 = vpop.f32.mrf.mxu0
      %v579 = vadd.f32 %v370, %v578
      %580 = vmatprep.mubr.bf16.mxu0 0
      %581 = vmatmul.mubr.bf16.gmra.mxu0 %v483
      %v582 = vpop.f32.mrf.mxu0
      %v583 = vadd.f32 %v366, %v582
      %v584 = vpop.f32.mrf.mxu0
      %v585 = vadd.f32 %v370, %v584
      %v586 = vpop.f32.mrf.mxu0
      %v587 = vadd.f32 %v366, %v586
      %v588 = vpop.f32.mrf.mxu0
      %v589 = vadd.f32 %v370, %v588
      %590 = vmatprep.mubr.bf16.mxu0 0
      %591 = vmatmul.mubr.bf16.gmra.mxu0 %v486
      %v592 = vpop.f32.mrf.mxu0
      %v593 = vadd.f32 %v366, %v592
      %v594 = vpop.f32.mrf.mxu0
      %v595 = vadd.f32 %v370, %v594
      %v596 = vpop.f32.mrf.mxu0
      %v597 = vadd.f32 %v366, %v596
      %v598 = vpop.f32.mrf.mxu0
      %v599 = vadd.f32 %v370, %v598
      %600 = vdwg.mxu0
      %601 = vmatprep.subr.bf16.mxu0 0
      %602 = vmatpush1.bf16.msra.mxu0 0
      %603 = vmatprep.subr.bf16.mxu0 0
      %604 = vmatpush1.bf16.msra.mxu0 0
      %605 = vmatprep.subr.bf16.mxu0 0
      %606 = vmatpush1.bf16.msra.mxu0 0
      %607 = vmatprep.subr.bf16.mxu0 0
      %608 = vmatpush1.bf16.msra.mxu0 0
      %609 = vmatprep.subr.bf16.mxu0 0
      %610 = vmatpush1.bf16.msra.mxu0 0
      %611 = vmatprep.subr.bf16.mxu0 0
      %612 = vmatpush1.bf16.msra.mxu0 0
      %613 = vmatprep.subr.bf16.mxu0 %v454
      %614 = vmatpush1.bf16.msra.mxu0 %v453
      %615 = vmatprep.subr.bf16.mxu0 %v450
      %616 = vmatpush1.bf16.msra.mxu0 %v449
      %617 = vmatprep.subr.bf16.mxu0 0
      %618 = vmatpush2.bf16.msra.mxu0 0
      %619 = vmatprep.subr.bf16.mxu0 0
      %620 = vmatpush2.bf16.msra.mxu0 0
      %621 = vmatprep.subr.bf16.mxu0 0
      %622 = vmatpush2.bf16.msra.mxu0 0
      %623 = vmatprep.subr.bf16.mxu0 0
      %624 = vmatpush2.bf16.msra.mxu0 0
      %625 = vmatprep.subr.bf16.mxu0 0
      %626 = vmatpush2.bf16.msra.mxu0 0
      %627 = vmatprep.subr.bf16.mxu0 0
      %628 = vmatpush2.bf16.msra.mxu0 0
      %629 = vmatprep.subr.bf16.mxu0 0
      %630 = vmatpush2.bf16.msra.mxu0 0
      %631 = vmatprep.subr.bf16.mxu0 0
      %632 = vmatpush2.bf16.msra.mxu0 0
      %633 = vmatprep.mubr.bf16.mxu0 0
      %634 = vmatmul.mubr.bf16.gmra.mxu0 %v465
      %v635 = vpop.f32.mrf.mxu0
      %v636 = vadd.f32 %v374, %v635
      %v637 = vpop.f32.mrf.mxu0
      %v638 = vadd.f32 %v378, %v637
      %v639 = vpop.f32.mrf.mxu0
      %v640 = vadd.f32 %v374, %v639
      %v641 = vpop.f32.mrf.mxu0
      %v642 = vadd.f32 %v378, %v641
      %643 = vmatprep.mubr.bf16.mxu0 0
      %644 = vmatmul.mubr.bf16.gmra.mxu0 %v468
      %v645 = vpop.f32.mrf.mxu0
      %v646 = vadd.f32 %v374, %v645
      %v647 = vpop.f32.mrf.mxu0
      %v648 = vadd.f32 %v378, %v647
      %v649 = vpop.f32.mrf.mxu0
      %v650 = vadd.f32 %v374, %v649
      %v651 = vpop.f32.mrf.mxu0
      %v652 = vadd.f32 %v378, %v651
      %653 = vmatprep.mubr.bf16.mxu0 0
      %654 = vmatmul.mubr.bf16.gmra.mxu0 %v471
      %v655 = vpop.f32.mrf.mxu0
      %v656 = vadd.f32 %v374, %v655
      %v657 = vpop.f32.mrf.mxu0
      %v658 = vadd.f32 %v378, %v657
      %v659 = vpop.f32.mrf.mxu0
      %v660 = vadd.f32 %v374, %v659
      %v661 = vpop.f32.mrf.mxu0
      %v662 = vadd.f32 %v378, %v661
      %663 = vmatprep.mubr.bf16.mxu0 0
      %664 = vmatmul.mubr.bf16.gmra.mxu0 %v474
      %v665 = vpop.f32.mrf.mxu0
      %v666 = vadd.f32 %v374, %v665
      %v667 = vpop.f32.mrf.mxu0
      %v668 = vadd.f32 %v378, %v667
      %v669 = vpop.f32.mrf.mxu0
      %v670 = vadd.f32 %v374, %v669
      %v671 = vpop.f32.mrf.mxu0
      %v672 = vadd.f32 %v378, %v671
      %673 = vmatprep.mubr.bf16.mxu0 0
      %674 = vmatmul.mubr.bf16.gmra.mxu0 %v477
      %v675 = vpop.f32.mrf.mxu0
      %v676 = vadd.f32 %v374, %v675
      %v677 = vpop.f32.mrf.mxu0
      %v678 = vadd.f32 %v378, %v677
      %v679 = vpop.f32.mrf.mxu0
      %v680 = vadd.f32 %v374, %v679
      %v681 = vpop.f32.mrf.mxu0
      %v682 = vadd.f32 %v378, %v681
      %683 = vmatprep.mubr.bf16.mxu0 0
      %684 = vmatmul.mubr.bf16.gmra.mxu0 %v480
      %v685 = vpop.f32.mrf.mxu0
      %v686 = vadd.f32 %v374, %v685
      %v687 = vpop.f32.mrf.mxu0
      %v688 = vadd.f32 %v378, %v687
      %v689 = vpop.f32.mrf.mxu0
      %v690 = vadd.f32 %v374, %v689
      %v691 = vpop.f32.mrf.mxu0
      %v692 = vadd.f32 %v378, %v691
      %693 = vmatprep.mubr.bf16.mxu0 0
      %694 = vmatmul.mubr.bf16.gmra.mxu0 %v483
      %v695 = vpop.f32.mrf.mxu0
      %v696 = vadd.f32 %v374, %v695
      %v697 = vpop.f32.mrf.mxu0
      %v698 = vadd.f32 %v378, %v697
      %v699 = vpop.f32.mrf.mxu0
      %v700 = vadd.f32 %v374, %v699
      %v701 = vpop.f32.mrf.mxu0
      %v702 = vadd.f32 %v378, %v701
      %703 = vmatprep.mubr.bf16.mxu0 0
      %704 = vmatmul.mubr.bf16.gmra.mxu0 %v486
      %v705 = vpop.f32.mrf.mxu0
      %v706 = vadd.f32 %v374, %v705
      %v707 = vpop.f32.mrf.mxu0
      %v708 = vadd.f32 %v378, %v707
      %v709 = vpop.f32.mrf.mxu0
      %v710 = vadd.f32 %v374, %v709
      %v711 = vpop.f32.mrf.mxu0
      %v712 = vadd.f32 %v378, %v711
      %713 = vdwg.mxu0
      %vm714 = vcmp.gt.f32.partialorder %v523, 0.0
      %vm715 = vcmp.gt.f32.partialorder %v525, 0.0
      %vm716 = vcmp.gt.f32.partialorder %v636, 0.0
      %vm717 = vcmp.gt.f32.partialorder %v638, 0.0
      %vm718 = vcmp.gt.f32.partialorder %v527, 0.0
      %vm719 = vcmp.gt.f32.partialorder %v529, 0.0
      %vm720 = vcmp.gt.f32.partialorder %v640, 0.0
      %vm721 = vcmp.gt.f32.partialorder %v642, 0.0
      %vm722 = vcmp.gt.f32.partialorder %v533, 0.0
      %vm723 = vcmp.gt.f32.partialorder %v535, 0.0
      %vm724 = vcmp.gt.f32.partialorder %v646, 0.0
      %vm725 = vcmp.gt.f32.partialorder %v648, 0.0
      %vm726 = vcmp.gt.f32.partialorder %v537, 0.0
      %vm727 = vcmp.gt.f32.partialorder %v539, 0.0
      %vm728 = vcmp.gt.f32.partialorder %v650, 0.0
      %vm729 = vcmp.gt.f32.partialorder %v652, 0.0
      %vm730 = vcmp.gt.f32.partialorder %v543, 0.0
      %vm731 = vcmp.gt.f32.partialorder %v545, 0.0
      %vm732 = vcmp.gt.f32.partialorder %v656, 0.0
      %vm733 = vcmp.gt.f32.partialorder %v658, 0.0
      %vm734 = vcmp.gt.f32.partialorder %v547, 0.0
      %vm735 = vcmp.gt.f32.partialorder %v549, 0.0
      %vm736 = vcmp.gt.f32.partialorder %v660, 0.0
      %vm737 = vcmp.gt.f32.partialorder %v662, 0.0
      %vm738 = vcmp.gt.f32.partialorder %v553, 0.0
      %vm739 = vcmp.gt.f32.partialorder %v555, 0.0
      %vm740 = vcmp.gt.f32.partialorder %v666, 0.0
      %vm741 = vcmp.gt.f32.partialorder %v668, 0.0
      %vm742 = vcmp.gt.f32.partialorder %v557, 0.0
      %vm743 = vcmp.gt.f32.partialorder %v559, 0.0
      %vm744 = vcmp.gt.f32.partialorder %v670, 0.0
      %vm745 = vcmp.gt.f32.partialorder %v672, 0.0
      %vm746 = vcmp.gt.f32.partialorder %v563, 0.0
      %vm747 = vcmp.gt.f32.partialorder %v565, 0.0
      %vm748 = vcmp.gt.f32.partialorder %v676, 0.0
      %vm749 = vcmp.gt.f32.partialorder %v678, 0.0
      %vm750 = vcmp.gt.f32.partialorder %v567, 0.0
      %vm751 = vcmp.gt.f32.partialorder %v569, 0.0
      %vm752 = vcmp.gt.f32.partialorder %v680, 0.0
      %vm753 = vcmp.gt.f32.partialorder %v682, 0.0
      %vm754 = vcmp.gt.f32.partialorder %v573, 0.0
      %vm755 = vcmp.gt.f32.partialorder %v575, 0.0
      %vm756 = vcmp.gt.f32.partialorder %v686, 0.0
      %vm757 = vcmp.gt.f32.partialorder %v688, 0.0
      %vm758 = vcmp.gt.f32.partialorder %v577, 0.0
      %vm759 = vcmp.gt.f32.partialorder %v579, 0.0
      %vm760 = vcmp.gt.f32.partialorder %v690, 0.0
      %vm761 = vcmp.gt.f32.partialorder %v692, 0.0
      %vm762 = vcmp.gt.f32.partialorder %v583, 0.0
      %vm763 = vcmp.gt.f32.partialorder %v585, 0.0
      %vm764 = vcmp.gt.f32.partialorder %v696, 0.0
      %vm765 = vcmp.gt.f32.partialorder %v698, 0.0
      %vm766 = vcmp.gt.f32.partialorder %v587, 0.0
      %vm767 = vcmp.gt.f32.partialorder %v589, 0.0
      %vm768 = vcmp.gt.f32.partialorder %v700, 0.0
      %vm769 = vcmp.gt.f32.partialorder %v702, 0.0
      %vm770 = vcmp.gt.f32.partialorder %v593, 0.0
      %vm771 = vcmp.gt.f32.partialorder %v595, 0.0
      %vm772 = vcmp.gt.f32.partialorder %v706, 0.0
      %vm773 = vcmp.gt.f32.partialorder %v708, 0.0
      %vm774 = vcmp.gt.f32.partialorder %v597, 0.0
      %vm775 = vcmp.gt.f32.partialorder %v599, 0.0
      %vm776 = vcmp.gt.f32.partialorder %v710, 0.0
      %vm777 = vcmp.gt.f32.partialorder %v712, 0.0
      %v778 = vmul.f32 %v523, 1.442695
      %v779 = vpow.pop %v778
      %v780 = vmul.f32 %v525, 1.442695
      %v781 = vpow.pop %v780
      %v782 = vmul.f32 %v636, 1.442695
      %v783 = vpow.pop %v782
      %v784 = vmul.f32 %v638, 1.442695
      %v785 = vpow.pop %v784
      %v786 = vmul.f32 %v527, 1.442695
      %v787 = vpow.pop %v786
      %v788 = vmul.f32 %v529, 1.442695
      %v789 = vpow.pop %v788
      %v790 = vmul.f32 %v640, 1.442695
      %v791 = vpow.pop %v790
      %v792 = vmul.f32 %v642, 1.442695
      %v793 = vpow.pop %v792
      %v794 = vmul.f32 %v533, 1.442695
      %v795 = vpow.pop %v794
      %v796 = vmul.f32 %v535, 1.442695
      %v797 = vpow.pop %v796
      %v798 = vmul.f32 %v646, 1.442695
      %v799 = vpow.pop %v798
      %v800 = vmul.f32 %v648, 1.442695
      %v801 = vpow.pop %v800
      %v802 = vmul.f32 %v537, 1.442695
      %v803 = vpow.pop %v802
      %v804 = vmul.f32 %v539, 1.442695
      %v805 = vpow.pop %v804
      %v806 = vmul.f32 %v650, 1.442695
      %v807 = vpow.pop %v806
      %v808 = vmul.f32 %v652, 1.442695
      %v809 = vpow.pop %v808
      %v810 = vmul.f32 %v543, 1.442695
      %v811 = vpow.pop %v810
      %v812 = vmul.f32 %v545, 1.442695
      %v813 = vpow.pop %v812
      %v814 = vmul.f32 %v656, 1.442695
      %v815 = vpow.pop %v814
      %v816 = vmul.f32 %v658, 1.442695
      %v817 = vpow.pop %v816
      %v818 = vmul.f32 %v547, 1.442695
      %v819 = vpow.pop %v818
      %v820 = vmul.f32 %v549, 1.442695
      %v821 = vpow.pop %v820
      %v822 = vmul.f32 %v660, 1.442695
      %v823 = vpow.pop %v822
      %v824 = vmul.f32 %v662, 1.442695
      %v825 = vpow.pop %v824
      %v826 = vmul.f32 %v553, 1.442695
      %v827 = vpow.pop %v826
      %v828 = vmul.f32 %v555, 1.442695
      %v829 = vpow.pop %v828
      %v830 = vmul.f32 %v666, 1.442695
      %v831 = vpow.pop %v830
      %v832 = vmul.f32 %v668, 1.442695
      %v833 = vpow.pop %v832
      %v834 = vmul.f32 %v557, 1.442695
      %v835 = vpow.pop %v834
      %v836 = vmul.f32 %v559, 1.442695
      %v837 = vpow.pop %v836
      %v838 = vmul.f32 %v670, 1.442695
      %v839 = vpow.pop %v838
      %v840 = vmul.f32 %v672, 1.442695
      %v841 = vpow.pop %v840
      %v842 = vmul.f32 %v563, 1.442695
      %v843 = vpow.pop %v842
      %v844 = vmul.f32 %v565, 1.442695
      %v845 = vpow.pop %v844
      %v846 = vmul.f32 %v676, 1.442695
      %v847 = vpow.pop %v846
      %v848 = vmul.f32 %v678, 1.442695
      %v849 = vpow.pop %v848
      %v850 = vmul.f32 %v567, 1.442695
      %v851 = vpow.pop %v850
      %v852 = vmul.f32 %v569, 1.442695
      %v853 = vpow.pop %v852
      %v854 = vmul.f32 %v680, 1.442695
      %v855 = vpow.pop %v854
      %v856 = vmul.f32 %v682, 1.442695
      %v857 = vpow.pop %v856
      %v858 = vmul.f32 %v573, 1.442695
      %v859 = vpow.pop %v858
      %v860 = vmul.f32 %v575, 1.442695
      %v861 = vpow.pop %v860
      %v862 = vmul.f32 %v686, 1.442695
      %v863 = vpow.pop %v862
      %v864 = vmul.f32 %v688, 1.442695
      %v865 = vpow.pop %v864
      %v866 = vmul.f32 %v577, 1.442695
      %v867 = vpow.pop %v866
      %v868 = vmul.f32 %v579, 1.442695
      %v869 = vpow.pop %v868
      %v870 = vmul.f32 %v690, 1.442695
      %v871 = vpow.pop %v870
      %v872 = vmul.f32 %v692, 1.442695
      %v873 = vpow.pop %v872
      %v874 = vmul.f32 %v583, 1.442695
      %v875 = vpow.pop %v874
      %v876 = vmul.f32 %v585, 1.442695
      %v877 = vpow.pop %v876
      %v878 = vmul.f32 %v696, 1.442695
      %v879 = vpow.pop %v878
      %v880 = vmul.f32 %v698, 1.442695
      %v881 = vpow.pop %v880
      %v882 = vmul.f32 %v587, 1.442695
      %v883 = vpow.pop %v882
      %v884 = vmul.f32 %v589, 1.442695
      %v885 = vpow.pop %v884
      %v886 = vmul.f32 %v700, 1.442695
      %v887 = vpow.pop %v886
      %v888 = vmul.f32 %v702, 1.442695
      %v889 = vpow.pop %v888
      %v890 = vmul.f32 %v593, 1.442695
      %v891 = vpow.pop %v890
      %v892 = vmul.f32 %v595, 1.442695
      %v893 = vpow.pop %v892
      %v894 = vmul.f32 %v706, 1.442695
      %v895 = vpow.pop %v894
      %v896 = vmul.f32 %v708, 1.442695
      %v897 = vpow.pop %v896
      %v898 = vmul.f32 %v597, 1.442695
      %v899 = vpow.pop %v898
      %v900 = vmul.f32 %v599, 1.442695
      %v901 = vpow.pop %v900
      %v902 = vmul.f32 %v710, 1.442695
      %v903 = vpow.pop %v902
      %v904 = vmul.f32 %v712, 1.442695
      %v905 = vpow.pop %v904
      %v906 = vsub.f32 %v779, 1.0
      %v907 = vsub.f32 %v781, 1.0
      %v908 = vsub.f32 %v783, 1.0
      %v909 = vsub.f32 %v785, 1.0
      %v910 = vsub.f32 %v787, 1.0
      %v911 = vsub.f32 %v789, 1.0
      %v912 = vsub.f32 %v791, 1.0
      %v913 = vsub.f32 %v793, 1.0
      %v914 = vsub.f32 %v795, 1.0
      %v915 = vsub.f32 %v797, 1.0
      %v916 = vsub.f32 %v799, 1.0
      %v917 = vsub.f32 %v801, 1.0
      %v918 = vsub.f32 %v803, 1.0
      %v919 = vsub.f32 %v805, 1.0
      %v920 = vsub.f32 %v807, 1.0
      %v921 = vsub.f32 %v809, 1.0
      %v922 = vsub.f32 %v811, 1.0
      %v923 = vsub.f32 %v813, 1.0
      %v924 = vsub.f32 %v815, 1.0
      %v925 = vsub.f32 %v817, 1.0
      %v926 = vsub.f32 %v819, 1.0
      %v927 = vsub.f32 %v821, 1.0
      %v928 = vsub.f32 %v823, 1.0
      %v929 = vsub.f32 %v825, 1.0
      %v930 = vsub.f32 %v827, 1.0
      %v931 = vsub.f32 %v829, 1.0
      %v932 = vsub.f32 %v831, 1.0
      %v933 = vsub.f32 %v833, 1.0
      %v934 = vsub.f32 %v835, 1.0
      %v935 = vsub.f32 %v837, 1.0
      %v936 = vsub.f32 %v839, 1.0
      %v937 = vsub.f32 %v841, 1.0
      %v938 = vsub.f32 %v843, 1.0
      %v939 = vsub.f32 %v845, 1.0
      %v940 = vsub.f32 %v847, 1.0
      %v941 = vsub.f32 %v849, 1.0
      %v942 = vsub.f32 %v851, 1.0
      %v943 = vsub.f32 %v853, 1.0
      %v944 = vsub.f32 %v855, 1.0
      %v945 = vsub.f32 %v857, 1.0
      %v946 = vsub.f32 %v859, 1.0
      %v947 = vsub.f32 %v861, 1.0
      %v948 = vsub.f32 %v863, 1.0
      %v949 = vsub.f32 %v865, 1.0
      %v950 = vsub.f32 %v867, 1.0
      %v951 = vsub.f32 %v869, 1.0
      %v952 = vsub.f32 %v871, 1.0
      %v953 = vsub.f32 %v873, 1.0
      %v954 = vsub.f32 %v875, 1.0
      %v955 = vsub.f32 %v877, 1.0
      %v956 = vsub.f32 %v879, 1.0
      %v957 = vsub.f32 %v881, 1.0
      %v958 = vsub.f32 %v883, 1.0
      %v959 = vsub.f32 %v885, 1.0
      %v960 = vsub.f32 %v887, 1.0
      %v961 = vsub.f32 %v889, 1.0
      %v962 = vsub.f32 %v891, 1.0
      %v963 = vsub.f32 %v893, 1.0
      %v964 = vsub.f32 %v895, 1.0
      %v965 = vsub.f32 %v897, 1.0
      %v966 = vsub.f32 %v899, 1.0
      %v967 = vsub.f32 %v901, 1.0
      %v968 = vsub.f32 %v903, 1.0
      %v969 = vsub.f32 %v905, 1.0
      %v970 = vsel %vm714, %v523, %v906
      %v971 = vsel %vm715, %v525, %v907
      %v972 = vsel %vm716, %v636, %v908
      %v973 = vsel %vm717, %v638, %v909
      %v974 = vsel %vm718, %v527, %v910
      %v975 = vsel %vm719, %v529, %v911
      %v976 = vsel %vm720, %v640, %v912
      %v977 = vsel %vm721, %v642, %v913
      %v978 = vsel %vm722, %v533, %v914
      %v979 = vsel %vm723, %v535, %v915
      %v980 = vsel %vm724, %v646, %v916
      %v981 = vsel %vm725, %v648, %v917
      %v982 = vsel %vm726, %v537, %v918
      %v983 = vsel %vm727, %v539, %v919
      %v984 = vsel %vm728, %v650, %v920
      %v985 = vsel %vm729, %v652, %v921
      %v986 = vsel %vm730, %v543, %v922
      %v987 = vsel %vm731, %v545, %v923
      %v988 = vsel %vm732, %v656, %v924
      %v989 = vsel %vm733, %v658, %v925
      %v990 = vsel %vm734, %v547, %v926
      %v991 = vsel %vm735, %v549, %v927
      %v992 = vsel %vm736, %v660, %v928
      %v993 = vsel %vm737, %v662, %v929
      %v994 = vsel %vm738, %v553, %v930
      %v995 = vsel %vm739, %v555, %v931
      %v996 = vsel %vm740, %v666, %v932
      %v997 = vsel %vm741, %v668, %v933
      %v998 = vsel %vm742, %v557, %v934
      %v999 = vsel %vm743, %v559, %v935
      %v1000 = vsel %vm744, %v670, %v936
      %v1001 = vsel %vm745, %v672, %v937
      %v1002 = vsel %vm746, %v563, %v938
      %v1003 = vsel %vm747, %v565, %v939
      %v1004 = vsel %vm748, %v676, %v940
      %v1005 = vsel %vm749, %v678, %v941
      %v1006 = vsel %vm750, %v567, %v942
      %v1007 = vsel %vm751, %v569, %v943
      %v1008 = vsel %vm752, %v680, %v944
      %v1009 = vsel %vm753, %v682, %v945
      %v1010 = vsel %vm754, %v573, %v946
      %v1011 = vsel %vm755, %v575, %v947
      %v1012 = vsel %vm756, %v686, %v948
      %v1013 = vsel %vm757, %v688, %v949
      %v1014 = vsel %vm758, %v577, %v950
      %v1015 = vsel %vm759, %v579, %v951
      %v1016 = vsel %vm760, %v690, %v952
      %v1017 = vsel %vm761, %v692, %v953
      %v1018 = vsel %vm762, %v583, %v954
      %v1019 = vsel %vm763, %v585, %v955
      %v1020 = vsel %vm764, %v696, %v956
      %v1021 = vsel %vm765, %v698, %v957
      %v1022 = vsel %vm766, %v587, %v958
      %v1023 = vsel %vm767, %v589, %v959
      %v1024 = vsel %vm768, %v700, %v960
      %v1025 = vsel %vm769, %v702, %v961
      %v1026 = vsel %vm770, %v593, %v962
      %v1027 = vsel %vm771, %v595, %v963
      %v1028 = vsel %vm772, %v706, %v964
      %v1029 = vsel %vm773, %v708, %v965
      %v1030 = vsel %vm774, %v597, %v966
      %v1031 = vsel %vm775, %v599, %v967
      %v1032 = vsel %vm776, %v710, %v968
      %v1033 = vsel %vm777, %v712, %v969
      %v1034 = vpack.c.bf16 %v974, %v970
      %v1035 = vpack.c.bf16 %v975, %v971
      %v1036 = vpack.c.bf16 %v976, %v972
      %v1037 = vpack.c.bf16 %v977, %v973
      %v1038 = vpack.c.bf16 %v982, %v978
      %v1039 = vpack.c.bf16 %v983, %v979
      %v1040 = vpack.c.bf16 %v984, %v980
      %v1041 = vpack.c.bf16 %v985, %v981
      %v1042 = vpack.c.bf16 %v990, %v986
      %v1043 = vpack.c.bf16 %v991, %v987
      %v1044 = vpack.c.bf16 %v992, %v988
      %v1045 = vpack.c.bf16 %v993, %v989
      %v1046 = vpack.c.bf16 %v998, %v994
      %v1047 = vpack.c.bf16 %v999, %v995
      %v1048 = vpack.c.bf16 %v1000, %v996
      %v1049 = vpack.c.bf16 %v1001, %v997
      %v1050 = vpack.c.bf16 %v1006, %v1002
      %v1051 = vpack.c.bf16 %v1007, %v1003
      %v1052 = vpack.c.bf16 %v1008, %v1004
      %v1053 = vpack.c.bf16 %v1009, %v1005
      %v1054 = vpack.c.bf16 %v1014, %v1010
      %v1055 = vpack.c.bf16 %v1015, %v1011
      %v1056 = vpack.c.bf16 %v1016, %v1012
      %v1057 = vpack.c.bf16 %v1017, %v1013
      %v1058 = vpack.c.bf16 %v1022, %v1018
      %v1059 = vpack.c.bf16 %v1023, %v1019
      %v1060 = vpack.c.bf16 %v1024, %v1020
      %v1061 = vpack.c.bf16 %v1025, %v1021
      %v1062 = vpack.c.bf16 %v1030, %v1026
      %v1063 = vpack.c.bf16 %v1031, %v1027
      %v1064 = vpack.c.bf16 %v1032, %v1028
      %v1065 = vpack.c.bf16 %v1033, %v1029
      %v1066 = vld [vmem:[%s3] sm:$0xff]
      %v1067 = vld [vmem:[%s3 + $0x8] sm:$0xff]
      %v1068 = vld [vmem:[%s3 + $0x10] sm:$0xff]
      %v1069 = vld [vmem:[%s3 + $0x18] sm:$0xff]
      %v1070 = vld [vmem:[%s3 + $0x20] sm:$0xff]
      %v1071 = vld [vmem:[%s3 + $0x28] sm:$0xff]
      %v1072 = vld [vmem:[%s3 + $0x30] sm:$0xff]
      %v1073 = vld [vmem:[%s3 + $0x38] sm:$0xff]
      %v1074 = vld [vmem:[%s3 + $0x40] sm:$0xff]
      %v1075 = vld [vmem:[%s3 + $0x48] sm:$0xff]
      %v1076 = vld [vmem:[%s3 + $0x50] sm:$0xff]
      %v1077 = vld [vmem:[%s3 + $0x58] sm:$0xff]
      %v1078 = vld [vmem:[%s3 + $0x60] sm:$0xff]
      %v1079 = vld [vmem:[%s3 + $0x68] sm:$0xff]
      %v1080 = vld [vmem:[%s3 + $0x70] sm:$0xff]
      %v1081 = vld [vmem:[%s3 + $0x78] sm:$0xff]
      %v1082 = vld [vmem:[%s3 + $0x80] sm:$0xff]
      %v1083 = vld [vmem:[%s3 + $0x88] sm:$0xff]
      %v1084 = vld [vmem:[%s3 + $0x90] sm:$0xff]
      %v1085 = vld [vmem:[%s3 + $0x98] sm:$0xff]
      %v1086 = vld [vmem:[%s3 + $0xa0] sm:$0xff]
      %v1087 = vld [vmem:[%s3 + $0xa8] sm:$0xff]
      %v1088 = vld [vmem:[%s3 + $0xb0] sm:$0xff]
      %v1089 = vld [vmem:[%s3 + $0xb8] sm:$0xff]
      %v1090 = vld [vmem:[%s3 + $0xc0] sm:$0xff]
      %v1091 = vld [vmem:[%s3 + $0xc8] sm:$0xff]
      %v1092 = vld [vmem:[%s3 + $0xd0] sm:$0xff]
      %v1093 = vld [vmem:[%s3 + $0xd8] sm:$0xff]
      %v1094 = vld [vmem:[%s3 + $0xe0] sm:$0xff]
      %v1095 = vld [vmem:[%s3 + $0xe8] sm:$0xff]
      %v1096 = vld [vmem:[%s3 + $0xf0] sm:$0xff]
      %v1097 = vld [vmem:[%s3 + $0xf8] sm:$0xff]
      %v1098 = vld [vmem:[%s3 + $0x100] sm:$0xff]
      %v1099 = vld [vmem:[%s3 + $0x108] sm:$0xff]
      %v1100 = vld [vmem:[%s3 + $0x110] sm:$0xff]
      %v1101 = vld [vmem:[%s3 + $0x118] sm:$0xff]
      %v1102 = vld [vmem:[%s3 + $0x120] sm:$0xff]
      %v1103 = vld [vmem:[%s3 + $0x128] sm:$0xff]
      %v1104 = vld [vmem:[%s3 + $0x130] sm:$0xff]
      %v1105 = vld [vmem:[%s3 + $0x138] sm:$0xff]
      %v1106 = vld [vmem:[%s3 + $0x140] sm:$0xff]
      %v1107 = vld [vmem:[%s3 + $0x148] sm:$0xff]
      %v1108 = vld [vmem:[%s3 + $0x150] sm:$0xff]
      %v1109 = vld [vmem:[%s3 + $0x158] sm:$0xff]
      %v1110 = vld [vmem:[%s3 + $0x160] sm:$0xff]
      %v1111 = vld [vmem:[%s3 + $0x168] sm:$0xff]
      %v1112 = vld [vmem:[%s3 + $0x170] sm:$0xff]
      %v1113 = vld [vmem:[%s3 + $0x178] sm:$0xff]
      %v1114 = vld [vmem:[%s3 + $0x180] sm:$0xff]
      %v1115 = vld [vmem:[%s3 + $0x188] sm:$0xff]
      %v1116 = vld [vmem:[%s3 + $0x190] sm:$0xff]
      %v1117 = vld [vmem:[%s3 + $0x198] sm:$0xff]
      %v1118 = vld [vmem:[%s3 + $0x1a0] sm:$0xff]
      %v1119 = vld [vmem:[%s3 + $0x1a8] sm:$0xff]
      %v1120 = vld [vmem:[%s3 + $0x1b0] sm:$0xff]
      %v1121 = vld [vmem:[%s3 + $0x1b8] sm:$0xff]
      %v1122 = vld [vmem:[%s3 + $0x1c0] sm:$0xff]
      %v1123 = vld [vmem:[%s3 + $0x1c8] sm:$0xff]
      %v1124 = vld [vmem:[%s3 + $0x1d0] sm:$0xff]
      %v1125 = vld [vmem:[%s3 + $0x1d8] sm:$0xff]
      %v1126 = vld [vmem:[%s3 + $0x1e0] sm:$0xff]
      %v1127 = vld [vmem:[%s3 + $0x1e8] sm:$0xff]
      %v1128 = vld [vmem:[%s3 + $0x1f0] sm:$0xff]
      %v1129 = vld [vmem:[%s3 + $0x1f8] sm:$0xff]
      %v1130 = vld [vmem:[%s4] sm:$0x3]
      %v1132 = vlaneseq
      %v1133 = vshrl.u32 %v1132, 7
      %v1134 = vsub.s32 0, %v1133
      %v1135 = vrot.slane %v1130, %v1134
      %v1136 = vlaneseq
      %v1137 = vshrl.u32 %v1136, 7
      %v1138 = vsub.s32 1, %v1137
      %v1139 = vrot.slane %v1130, %v1138
      %v1206 = vunpack.c.l.b16 %v1066
      %v1207 = vunpack.c.h.b16 %v1066
      %v1208 = vunpack.c.l.b16 %v1067
      %v1209 = vunpack.c.h.b16 %v1067
      %v1210 = vunpack.c.l.b16 %v1068
      %v1211 = vunpack.c.h.b16 %v1068
      %v1212 = vunpack.c.l.b16 %v1069
      %v1213 = vunpack.c.h.b16 %v1069
      %v1214 = vunpack.c.l.b16 %v1070
      %v1215 = vunpack.c.h.b16 %v1070
      %v1216 = vunpack.c.l.b16 %v1071
      %v1217 = vunpack.c.h.b16 %v1071
      %v1218 = vunpack.c.l.b16 %v1072
      %v1219 = vunpack.c.h.b16 %v1072
      %v1220 = vunpack.c.l.b16 %v1073
      %v1221 = vunpack.c.h.b16 %v1073
      %v1222 = vunpack.c.l.b16 %v1074
      %v1223 = vunpack.c.h.b16 %v1074
      %v1224 = vunpack.c.l.b16 %v1075
      %v1225 = vunpack.c.h.b16 %v1075
      %v1226 = vunpack.c.l.b16 %v1076
      %v1227 = vunpack.c.h.b16 %v1076
      %v1228 = vunpack.c.l.b16 %v1077
      %v1229 = vunpack.c.h.b16 %v1077
      %v1230 = vunpack.c.l.b16 %v1078
      %v1231 = vunpack.c.h.b16 %v1078
      %v1232 = vunpack.c.l.b16 %v1079
      %v1233 = vunpack.c.h.b16 %v1079
      %v1234 = vunpack.c.l.b16 %v1080
      %v1235 = vunpack.c.h.b16 %v1080
      %v1236 = vunpack.c.l.b16 %v1081
      %v1237 = vunpack.c.h.b16 %v1081
      %v1238 = vunpack.c.l.b16 %v1082
      %v1239 = vunpack.c.h.b16 %v1082
      %v1240 = vunpack.c.l.b16 %v1083
      %v1241 = vunpack.c.h.b16 %v1083
      %v1242 = vunpack.c.l.b16 %v1084
      %v1243 = vunpack.c.h.b16 %v1084
      %v1244 = vunpack.c.l.b16 %v1085
      %v1245 = vunpack.c.h.b16 %v1085
      %v1246 = vunpack.c.l.b16 %v1086
      %v1247 = vunpack.c.h.b16 %v1086
      %v1248 = vunpack.c.l.b16 %v1087
      %v1249 = vunpack.c.h.b16 %v1087
      %v1250 = vunpack.c.l.b16 %v1088
      %v1251 = vunpack.c.h.b16 %v1088
      %v1252 = vunpack.c.l.b16 %v1089
      %v1253 = vunpack.c.h.b16 %v1089
      %v1254 = vunpack.c.l.b16 %v1090
      %v1255 = vunpack.c.h.b16 %v1090
      %v1256 = vunpack.c.l.b16 %v1091
      %v1257 = vunpack.c.h.b16 %v1091
      %v1258 = vunpack.c.l.b16 %v1092
      %v1259 = vunpack.c.h.b16 %v1092
      %v1260 = vunpack.c.l.b16 %v1093
      %v1261 = vunpack.c.h.b16 %v1093
      %v1262 = vunpack.c.l.b16 %v1094
      %v1263 = vunpack.c.h.b16 %v1094
      %v1264 = vunpack.c.l.b16 %v1095
      %v1265 = vunpack.c.h.b16 %v1095
      %v1266 = vunpack.c.l.b16 %v1096
      %v1267 = vunpack.c.h.b16 %v1096
      %v1268 = vunpack.c.l.b16 %v1097
      %v1269 = vunpack.c.h.b16 %v1097
      %v1270 = vunpack.c.l.b16 %v1098
      %v1271 = vunpack.c.h.b16 %v1098
      %v1272 = vunpack.c.l.b16 %v1099
      %v1273 = vunpack.c.h.b16 %v1099
      %v1274 = vunpack.c.l.b16 %v1100
      %v1275 = vunpack.c.h.b16 %v1100
      %v1276 = vunpack.c.l.b16 %v1101
      %v1277 = vunpack.c.h.b16 %v1101
      %v1278 = vunpack.c.l.b16 %v1102
      %v1279 = vunpack.c.h.b16 %v1102
      %v1280 = vunpack.c.l.b16 %v1103
      %v1281 = vunpack.c.h.b16 %v1103
      %v1282 = vunpack.c.l.b16 %v1104
      %v1283 = vunpack.c.h.b16 %v1104
      %v1284 = vunpack.c.l.b16 %v1105
      %v1285 = vunpack.c.h.b16 %v1105
      %v1286 = vunpack.c.l.b16 %v1106
      %v1287 = vunpack.c.h.b16 %v1106
      %v1288 = vunpack.c.l.b16 %v1107
      %v1289 = vunpack.c.h.b16 %v1107
      %v1290 = vunpack.c.l.b16 %v1108
      %v1291 = vunpack.c.h.b16 %v1108
      %v1292 = vunpack.c.l.b16 %v1109
      %v1293 = vunpack.c.h.b16 %v1109
      %v1294 = vunpack.c.l.b16 %v1110
      %v1295 = vunpack.c.h.b16 %v1110
      %v1296 = vunpack.c.l.b16 %v1111
      %v1297 = vunpack.c.h.b16 %v1111
      %v1298 = vunpack.c.l.b16 %v1112
      %v1299 = vunpack.c.h.b16 %v1112
      %v1300 = vunpack.c.l.b16 %v1113
      %v1301 = vunpack.c.h.b16 %v1113
      %v1302 = vunpack.c.l.b16 %v1114
      %v1303 = vunpack.c.h.b16 %v1114
      %v1304 = vunpack.c.l.b16 %v1115
      %v1305 = vunpack.c.h.b16 %v1115
      %v1306 = vunpack.c.l.b16 %v1116
      %v1307 = vunpack.c.h.b16 %v1116
      %v1308 = vunpack.c.l.b16 %v1117
      %v1309 = vunpack.c.h.b16 %v1117
      %v1310 = vunpack.c.l.b16 %v1118
      %v1311 = vunpack.c.h.b16 %v1118
      %v1312 = vunpack.c.l.b16 %v1119
      %v1313 = vunpack.c.h.b16 %v1119
      %v1314 = vunpack.c.l.b16 %v1120
      %v1315 = vunpack.c.h.b16 %v1120
      %v1316 = vunpack.c.l.b16 %v1121
      %v1317 = vunpack.c.h.b16 %v1121
      %v1318 = vunpack.c.l.b16 %v1122
      %v1319 = vunpack.c.h.b16 %v1122
      %v1320 = vunpack.c.l.b16 %v1123
      %v1321 = vunpack.c.h.b16 %v1123
      %v1322 = vunpack.c.l.b16 %v1124
      %v1323 = vunpack.c.h.b16 %v1124
      %v1324 = vunpack.c.l.b16 %v1125
      %v1325 = vunpack.c.h.b16 %v1125
      %v1326 = vunpack.c.l.b16 %v1126
      %v1327 = vunpack.c.h.b16 %v1126
      %v1328 = vunpack.c.l.b16 %v1127
      %v1329 = vunpack.c.h.b16 %v1127
      %v1330 = vunpack.c.l.b16 %v1128
      %v1331 = vunpack.c.h.b16 %v1128
      %v1332 = vunpack.c.l.b16 %v1129
      %v1333 = vunpack.c.h.b16 %v1129
      %v1334 = vpack.c.b16 %v1208, %v1206
      %v1335 = vpack.c.b16 %v1209, %v1207
      %v1336 = vpack.c.b16 %v1212, %v1210
      %v1337 = vpack.c.b16 %v1213, %v1211
      %v1338 = vpack.c.b16 %v1216, %v1214
      %v1339 = vpack.c.b16 %v1217, %v1215
      %v1340 = vpack.c.b16 %v1220, %v1218
      %v1341 = vpack.c.b16 %v1221, %v1219
      %v1342 = vpack.c.b16 %v1224, %v1222
      %v1343 = vpack.c.b16 %v1225, %v1223
      %v1344 = vpack.c.b16 %v1228, %v1226
      %v1345 = vpack.c.b16 %v1229, %v1227
      %v1346 = vpack.c.b16 %v1232, %v1230
      %v1347 = vpack.c.b16 %v1233, %v1231
      %v1348 = vpack.c.b16 %v1236, %v1234
      %v1349 = vpack.c.b16 %v1237, %v1235
      %v1350 = vpack.c.b16 %v1240, %v1238
      %v1351 = vpack.c.b16 %v1241, %v1239
      %v1352 = vpack.c.b16 %v1244, %v1242
      %v1353 = vpack.c.b16 %v1245, %v1243
      %v1354 = vpack.c.b16 %v1248, %v1246
      %v1355 = vpack.c.b16 %v1249, %v1247
      %v1356 = vpack.c.b16 %v1252, %v1250
      %v1357 = vpack.c.b16 %v1253, %v1251
      %v1358 = vpack.c.b16 %v1256, %v1254
      %v1359 = vpack.c.b16 %v1257, %v1255
      %v1360 = vpack.c.b16 %v1260, %v1258
      %v1361 = vpack.c.b16 %v1261, %v1259
      %v1362 = vpack.c.b16 %v1264, %v1262
      %v1363 = vpack.c.b16 %v1265, %v1263
      %v1364 = vpack.c.b16 %v1268, %v1266
      %v1365 = vpack.c.b16 %v1269, %v1267
      %v1366 = vpack.c.b16 %v1272, %v1270
      %v1367 = vpack.c.b16 %v1273, %v1271
      %v1368 = vpack.c.b16 %v1276, %v1274
      %v1369 = vpack.c.b16 %v1277, %v1275
      %v1370 = vpack.c.b16 %v1280, %v1278
      %v1371 = vpack.c.b16 %v1281, %v1279
      %v1372 = vpack.c.b16 %v1284, %v1282
      %v1373 = vpack.c.b16 %v1285, %v1283
      %v1374 = vpack.c.b16 %v1288, %v1286
      %v1375 = vpack.c.b16 %v1289, %v1287
      %v1376 = vpack.c.b16 %v1292, %v1290
      %v1377 = vpack.c.b16 %v1293, %v1291
      %v1378 = vpack.c.b16 %v1296, %v1294
      %v1379 = vpack.c.b16 %v1297, %v1295
      %v1380 = vpack.c.b16 %v1300, %v1298
      %v1381 = vpack.c.b16 %v1301, %v1299
      %v1382 = vpack.c.b16 %v1304, %v1302
      %v1383 = vpack.c.b16 %v1305, %v1303
      %v1384 = vpack.c.b16 %v1308, %v1306
      %v1385 = vpack.c.b16 %v1309, %v1307
      %v1386 = vpack.c.b16 %v1312, %v1310
      %v1387 = vpack.c.b16 %v1313, %v1311
      %v1388 = vpack.c.b16 %v1316, %v1314
      %v1389 = vpack.c.b16 %v1317, %v1315
      %v1390 = vpack.c.b16 %v1320, %v1318
      %v1391 = vpack.c.b16 %v1321, %v1319
      %v1392 = vpack.c.b16 %v1324, %v1322
      %v1393 = vpack.c.b16 %v1325, %v1323
      %v1394 = vpack.c.b16 %v1328, %v1326
      %v1395 = vpack.c.b16 %v1329, %v1327
      %v1396 = vpack.c.b16 %v1332, %v1330
      %v1397 = vpack.c.b16 %v1333, %v1331
      %1462 = vmatprep.subr.bf16.mxu0 %v1349
      %1463 = vmatpush1.bf16.msra.mxu0 %v1348
      %1464 = vmatprep.subr.bf16.mxu0 %v1347
      %1465 = vmatpush1.bf16.msra.mxu0 %v1346
      %1466 = vmatprep.subr.bf16.mxu0 %v1345
      %1467 = vmatpush1.bf16.msra.mxu0 %v1344
      %1468 = vmatprep.subr.bf16.mxu0 %v1343
      %1469 = vmatpush1.bf16.msra.mxu0 %v1342
      %1470 = vmatprep.subr.bf16.mxu0 %v1341
      %1471 = vmatpush1.bf16.msra.mxu0 %v1340
      %1472 = vmatprep.subr.bf16.mxu0 %v1339
      %1473 = vmatpush1.bf16.msra.mxu0 %v1338
      %1474 = vmatprep.subr.bf16.mxu0 %v1337
      %1475 = vmatpush1.bf16.msra.mxu0 %v1336
      %1476 = vmatprep.subr.bf16.mxu0 %v1335
      %1477 = vmatpush1.bf16.msra.mxu0 %v1334
      %1478 = vmatprep.subr.bf16.mxu0 %v1365
      %1479 = vmatpush2.bf16.msra.mxu0 %v1364
      %1480 = vmatprep.subr.bf16.mxu0 %v1363
      %1481 = vmatpush2.bf16.msra.mxu0 %v1362
      %1482 = vmatprep.subr.bf16.mxu0 %v1361
      %1483 = vmatpush2.bf16.msra.mxu0 %v1360
      %1484 = vmatprep.subr.bf16.mxu0 %v1359
      %1485 = vmatpush2.bf16.msra.mxu0 %v1358
      %1486 = vmatprep.subr.bf16.mxu0 %v1357
      %1487 = vmatpush2.bf16.msra.mxu0 %v1356
      %1488 = vmatprep.subr.bf16.mxu0 %v1355
      %1489 = vmatpush2.bf16.msra.mxu0 %v1354
      %1490 = vmatprep.subr.bf16.mxu0 %v1353
      %1491 = vmatpush2.bf16.msra.mxu0 %v1352
      %1492 = vmatprep.subr.bf16.mxu0 %v1351
      %1493 = vmatpush2.bf16.msra.mxu0 %v1350
      %1494 = vmatprep.mubr.bf16.mxu0 %v1035
      %1495 = vmatmul.mubr.bf16.gmra.mxu0 %v1034
      %v1496 = vpop.f32.mrf.mxu0
      %v1497 = vadd.f32 %v1135, %v1496
      %v1498 = vpop.f32.mrf.mxu0
      %v1499 = vadd.f32 %v1139, %v1498
      %v1500 = vpop.f32.mrf.mxu0
      %v1501 = vadd.f32 %v1135, %v1500
      %v1502 = vpop.f32.mrf.mxu0
      %v1503 = vadd.f32 %v1139, %v1502
      %1504 = vmatprep.mubr.bf16.mxu0 %v1039
      %1505 = vmatmul.mubr.bf16.gmra.mxu0 %v1038
      %v1506 = vpop.f32.mrf.mxu0
      %v1507 = vadd.f32 %v1135, %v1506
      %v1508 = vpop.f32.mrf.mxu0
      %v1509 = vadd.f32 %v1139, %v1508
      %v1510 = vpop.f32.mrf.mxu0
      %v1511 = vadd.f32 %v1135, %v1510
      %v1512 = vpop.f32.mrf.mxu0
      %v1513 = vadd.f32 %v1139, %v1512
      %1514 = vmatprep.mubr.bf16.mxu0 %v1043
      %1515 = vmatmul.mubr.bf16.gmra.mxu0 %v1042
      %v1516 = vpop.f32.mrf.mxu0
      %v1517 = vadd.f32 %v1135, %v1516
      %v1518 = vpop.f32.mrf.mxu0
      %v1519 = vadd.f32 %v1139, %v1518
      %v1520 = vpop.f32.mrf.mxu0
      %v1521 = vadd.f32 %v1135, %v1520
      %v1522 = vpop.f32.mrf.mxu0
      %v1523 = vadd.f32 %v1139, %v1522
      %1524 = vmatprep.mubr.bf16.mxu0 %v1047
      %1525 = vmatmul.mubr.bf16.gmra.mxu0 %v1046
      %v1526 = vpop.f32.mrf.mxu0
      %v1527 = vadd.f32 %v1135, %v1526
      %v1528 = vpop.f32.mrf.mxu0
      %v1529 = vadd.f32 %v1139, %v1528
      %v1530 = vpop.f32.mrf.mxu0
      %v1531 = vadd.f32 %v1135, %v1530
      %v1532 = vpop.f32.mrf.mxu0
      %v1533 = vadd.f32 %v1139, %v1532
      %1534 = vmatprep.mubr.bf16.mxu0 %v1051
      %1535 = vmatmul.mubr.bf16.gmra.mxu0 %v1050
      %v1536 = vpop.f32.mrf.mxu0
      %v1537 = vadd.f32 %v1135, %v1536
      %v1538 = vpop.f32.mrf.mxu0
      %v1539 = vadd.f32 %v1139, %v1538
      %v1540 = vpop.f32.mrf.mxu0
      %v1541 = vadd.f32 %v1135, %v1540
      %v1542 = vpop.f32.mrf.mxu0
      %v1543 = vadd.f32 %v1139, %v1542
      %1544 = vmatprep.mubr.bf16.mxu0 %v1055
      %1545 = vmatmul.mubr.bf16.gmra.mxu0 %v1054
      %v1546 = vpop.f32.mrf.mxu0
      %v1547 = vadd.f32 %v1135, %v1546
      %v1548 = vpop.f32.mrf.mxu0
      %v1549 = vadd.f32 %v1139, %v1548
      %v1550 = vpop.f32.mrf.mxu0
      %v1551 = vadd.f32 %v1135, %v1550
      %v1552 = vpop.f32.mrf.mxu0
      %v1553 = vadd.f32 %v1139, %v1552
      %1554 = vmatprep.mubr.bf16.mxu0 %v1059
      %1555 = vmatmul.mubr.bf16.gmra.mxu0 %v1058
      %v1556 = vpop.f32.mrf.mxu0
      %v1557 = vadd.f32 %v1135, %v1556
      %v1558 = vpop.f32.mrf.mxu0
      %v1559 = vadd.f32 %v1139, %v1558
      %v1560 = vpop.f32.mrf.mxu0
      %v1561 = vadd.f32 %v1135, %v1560
      %v1562 = vpop.f32.mrf.mxu0
      %v1563 = vadd.f32 %v1139, %v1562
      %1564 = vmatprep.mubr.bf16.mxu0 %v1063
      %1565 = vmatmul.mubr.bf16.gmra.mxu0 %v1062
      %v1566 = vpop.f32.mrf.mxu0
      %v1567 = vadd.f32 %v1135, %v1566
      %v1568 = vpop.f32.mrf.mxu0
      %v1569 = vadd.f32 %v1139, %v1568
      %v1570 = vpop.f32.mrf.mxu0
      %v1571 = vadd.f32 %v1135, %v1570
      %v1572 = vpop.f32.mrf.mxu0
      %v1573 = vadd.f32 %v1139, %v1572
      %1574 = vdwg.mxu0
      %1575 = vmatprep.subr.bf16.mxu0 %v1381
      %1576 = vmatpush1.bf16.msra.mxu0 %v1380
      %1577 = vmatprep.subr.bf16.mxu0 %v1379
      %1578 = vmatpush1.bf16.msra.mxu0 %v1378
      %1579 = vmatprep.subr.bf16.mxu0 %v1377
      %1580 = vmatpush1.bf16.msra.mxu0 %v1376
      %1581 = vmatprep.subr.bf16.mxu0 %v1375
      %1582 = vmatpush1.bf16.msra.mxu0 %v1374
      %1583 = vmatprep.subr.bf16.mxu0 %v1373
      %1584 = vmatpush1.bf16.msra.mxu0 %v1372
      %1585 = vmatprep.subr.bf16.mxu0 %v1371
      %1586 = vmatpush1.bf16.msra.mxu0 %v1370
      %1587 = vmatprep.subr.bf16.mxu0 %v1369
      %1588 = vmatpush1.bf16.msra.mxu0 %v1368
      %1589 = vmatprep.subr.bf16.mxu0 %v1367
      %1590 = vmatpush1.bf16.msra.mxu0 %v1366
      %1591 = vmatprep.subr.bf16.mxu0 %v1397
      %1592 = vmatpush2.bf16.msra.mxu0 %v1396
      %1593 = vmatprep.subr.bf16.mxu0 %v1395
      %1594 = vmatpush2.bf16.msra.mxu0 %v1394
      %1595 = vmatprep.subr.bf16.mxu0 %v1393
      %1596 = vmatpush2.bf16.msra.mxu0 %v1392
      %1597 = vmatprep.subr.bf16.mxu0 %v1391
      %1598 = vmatpush2.bf16.msra.mxu0 %v1390
      %1599 = vmatprep.subr.bf16.mxu0 %v1389
      %1600 = vmatpush2.bf16.msra.mxu0 %v1388
      %1601 = vmatprep.subr.bf16.mxu0 %v1387
      %1602 = vmatpush2.bf16.msra.mxu0 %v1386
      %1603 = vmatprep.subr.bf16.mxu0 %v1385
      %1604 = vmatpush2.bf16.msra.mxu0 %v1384
      %1605 = vmatprep.subr.bf16.mxu0 %v1383
      %1606 = vmatpush2.bf16.msra.mxu0 %v1382
      %1607 = vmatprep.mubr.bf16.mxu0 %v1037
      %1608 = vmatmul.mubr.bf16.gmra.mxu0 %v1036
      %v1609 = vpop.f32.mrf.mxu0
      %v1610 = vadd.f32 %v1497, %v1609
      %v1611 = vpop.f32.mrf.mxu0
      %v1612 = vadd.f32 %v1499, %v1611
      %v1613 = vpop.f32.mrf.mxu0
      %v1614 = vadd.f32 %v1501, %v1613
      %v1615 = vpop.f32.mrf.mxu0
      %v1616 = vadd.f32 %v1503, %v1615
      %1617 = vmatprep.mubr.bf16.mxu0 %v1041
      %1618 = vmatmul.mubr.bf16.gmra.mxu0 %v1040
      %v1619 = vpop.f32.mrf.mxu0
      %v1620 = vadd.f32 %v1507, %v1619
      %v1621 = vpop.f32.mrf.mxu0
      %v1622 = vadd.f32 %v1509, %v1621
      %v1623 = vpop.f32.mrf.mxu0
      %v1624 = vadd.f32 %v1511, %v1623
      %v1625 = vpop.f32.mrf.mxu0
      %v1626 = vadd.f32 %v1513, %v1625
      %1627 = vmatprep.mubr.bf16.mxu0 %v1045
      %1628 = vmatmul.mubr.bf16.gmra.mxu0 %v1044
      %v1629 = vpop.f32.mrf.mxu0
      %v1630 = vadd.f32 %v1517, %v1629
      %v1631 = vpop.f32.mrf.mxu0
      %v1632 = vadd.f32 %v1519, %v1631
      %v1633 = vpop.f32.mrf.mxu0
      %v1634 = vadd.f32 %v1521, %v1633
      %v1635 = vpop.f32.mrf.mxu0
      %v1636 = vadd.f32 %v1523, %v1635
      %1637 = vmatprep.mubr.bf16.mxu0 %v1049
      %1638 = vmatmul.mubr.bf16.gmra.mxu0 %v1048
      %v1639 = vpop.f32.mrf.mxu0
      %v1640 = vadd.f32 %v1527, %v1639
      %v1641 = vpop.f32.mrf.mxu0
      %v1642 = vadd.f32 %v1529, %v1641
      %v1643 = vpop.f32.mrf.mxu0
      %v1644 = vadd.f32 %v1531, %v1643
      %v1645 = vpop.f32.mrf.mxu0
      %v1646 = vadd.f32 %v1533, %v1645
      %1647 = vmatprep.mubr.bf16.mxu0 %v1053
      %1648 = vmatmul.mubr.bf16.gmra.mxu0 %v1052
      %v1649 = vpop.f32.mrf.mxu0
      %v1650 = vadd.f32 %v1537, %v1649
      %v1651 = vpop.f32.mrf.mxu0
      %v1652 = vadd.f32 %v1539, %v1651
      %v1653 = vpop.f32.mrf.mxu0
      %v1654 = vadd.f32 %v1541, %v1653
      %v1655 = vpop.f32.mrf.mxu0
      %v1656 = vadd.f32 %v1543, %v1655
      %1657 = vmatprep.mubr.bf16.mxu0 %v1057
      %1658 = vmatmul.mubr.bf16.gmra.mxu0 %v1056
      %v1659 = vpop.f32.mrf.mxu0
      %v1660 = vadd.f32 %v1547, %v1659
      %v1661 = vpop.f32.mrf.mxu0
      %v1662 = vadd.f32 %v1549, %v1661
      %v1663 = vpop.f32.mrf.mxu0
      %v1664 = vadd.f32 %v1551, %v1663
      %v1665 = vpop.f32.mrf.mxu0
      %v1666 = vadd.f32 %v1553, %v1665
      %1667 = vmatprep.mubr.bf16.mxu0 %v1061
      %1668 = vmatmul.mubr.bf16.gmra.mxu0 %v1060
      %v1669 = vpop.f32.mrf.mxu0
      %v1670 = vadd.f32 %v1557, %v1669
      %v1671 = vpop.f32.mrf.mxu0
      %v1672 = vadd.f32 %v1559, %v1671
      %v1673 = vpop.f32.mrf.mxu0
      %v1674 = vadd.f32 %v1561, %v1673
      %v1675 = vpop.f32.mrf.mxu0
      %v1676 = vadd.f32 %v1563, %v1675
      %1677 = vmatprep.mubr.bf16.mxu0 %v1065
      %1678 = vmatmul.mubr.bf16.gmra.mxu0 %v1064
      %v1679 = vpop.f32.mrf.mxu0
      %v1680 = vadd.f32 %v1567, %v1679
      %v1681 = vpop.f32.mrf.mxu0
      %v1682 = vadd.f32 %v1569, %v1681
      %v1683 = vpop.f32.mrf.mxu0
      %v1684 = vadd.f32 %v1571, %v1683
      %v1685 = vpop.f32.mrf.mxu0
      %v1686 = vadd.f32 %v1573, %v1685
      %1687 = vdwg.mxu0
      %vm1688 = vcmp.gt.f32.partialorder %v1610, 0.0
      %vm1689 = vcmp.gt.f32.partialorder %v1612, 0.0
      %vm1690 = vcmp.gt.f32.partialorder %v1614, 0.0
      %vm1691 = vcmp.gt.f32.partialorder %v1616, 0.0
      %vm1692 = vcmp.gt.f32.partialorder %v1620, 0.0
      %vm1693 = vcmp.gt.f32.partialorder %v1622, 0.0
      %vm1694 = vcmp.gt.f32.partialorder %v1624, 0.0
      %vm1695 = vcmp.gt.f32.partialorder %v1626, 0.0
      %vm1696 = vcmp.gt.f32.partialorder %v1630, 0.0
      %vm1697 = vcmp.gt.f32.partialorder %v1632, 0.0
      %vm1698 = vcmp.gt.f32.partialorder %v1634, 0.0
      %vm1699 = vcmp.gt.f32.partialorder %v1636, 0.0
      %vm1700 = vcmp.gt.f32.partialorder %v1640, 0.0
      %vm1701 = vcmp.gt.f32.partialorder %v1642, 0.0
      %vm1702 = vcmp.gt.f32.partialorder %v1644, 0.0
      %vm1703 = vcmp.gt.f32.partialorder %v1646, 0.0
      %vm1704 = vcmp.gt.f32.partialorder %v1650, 0.0
      %vm1705 = vcmp.gt.f32.partialorder %v1652, 0.0
      %vm1706 = vcmp.gt.f32.partialorder %v1654, 0.0
      %vm1707 = vcmp.gt.f32.partialorder %v1656, 0.0
      %vm1708 = vcmp.gt.f32.partialorder %v1660, 0.0
      %vm1709 = vcmp.gt.f32.partialorder %v1662, 0.0
      %vm1710 = vcmp.gt.f32.partialorder %v1664, 0.0
      %vm1711 = vcmp.gt.f32.partialorder %v1666, 0.0
      %vm1712 = vcmp.gt.f32.partialorder %v1670, 0.0
      %vm1713 = vcmp.gt.f32.partialorder %v1672, 0.0
      %vm1714 = vcmp.gt.f32.partialorder %v1674, 0.0
      %vm1715 = vcmp.gt.f32.partialorder %v1676, 0.0
      %vm1716 = vcmp.gt.f32.partialorder %v1680, 0.0
      %vm1717 = vcmp.gt.f32.partialorder %v1682, 0.0
      %vm1718 = vcmp.gt.f32.partialorder %v1684, 0.0
      %vm1719 = vcmp.gt.f32.partialorder %v1686, 0.0
      %v1720 = vmul.f32 %v1610, 1.442695
      %v1721 = vpow.pop %v1720
      %v1722 = vmul.f32 %v1612, 1.442695
      %v1723 = vpow.pop %v1722
      %v1724 = vmul.f32 %v1614, 1.442695
      %v1725 = vpow.pop %v1724
      %v1726 = vmul.f32 %v1616, 1.442695
      %v1727 = vpow.pop %v1726
      %v1728 = vmul.f32 %v1620, 1.442695
      %v1729 = vpow.pop %v1728
      %v1730 = vmul.f32 %v1622, 1.442695
      %v1731 = vpow.pop %v1730
      %v1732 = vmul.f32 %v1624, 1.442695
      %v1733 = vpow.pop %v1732
      %v1734 = vmul.f32 %v1626, 1.442695
      %v1735 = vpow.pop %v1734
      %v1736 = vmul.f32 %v1630, 1.442695
      %v1737 = vpow.pop %v1736
      %v1738 = vmul.f32 %v1632, 1.442695
      %v1739 = vpow.pop %v1738
      %v1740 = vmul.f32 %v1634, 1.442695
      %v1741 = vpow.pop %v1740
      %v1742 = vmul.f32 %v1636, 1.442695
      %v1743 = vpow.pop %v1742
      %v1744 = vmul.f32 %v1640, 1.442695
      %v1745 = vpow.pop %v1744
      %v1746 = vmul.f32 %v1642, 1.442695
      %v1747 = vpow.pop %v1746
      %v1748 = vmul.f32 %v1644, 1.442695
      %v1749 = vpow.pop %v1748
      %v1750 = vmul.f32 %v1646, 1.442695
      %v1751 = vpow.pop %v1750
      %v1752 = vmul.f32 %v1650, 1.442695
      %v1753 = vpow.pop %v1752
      %v1754 = vmul.f32 %v1652, 1.442695
      %v1755 = vpow.pop %v1754
      %v1756 = vmul.f32 %v1654, 1.442695
      %v1757 = vpow.pop %v1756
      %v1758 = vmul.f32 %v1656, 1.442695
      %v1759 = vpow.pop %v1758
      %v1760 = vmul.f32 %v1660, 1.442695
      %v1761 = vpow.pop %v1760
      %v1762 = vmul.f32 %v1662, 1.442695
      %v1763 = vpow.pop %v1762
      %v1764 = vmul.f32 %v1664, 1.442695
      %v1765 = vpow.pop %v1764
      %v1766 = vmul.f32 %v1666, 1.442695
      %v1767 = vpow.pop %v1766
      %v1768 = vmul.f32 %v1670, 1.442695
      %v1769 = vpow.pop %v1768
      %v1770 = vmul.f32 %v1672, 1.442695
      %v1771 = vpow.pop %v1770
      %v1772 = vmul.f32 %v1674, 1.442695
      %v1773 = vpow.pop %v1772
      %v1774 = vmul.f32 %v1676, 1.442695
      %v1775 = vpow.pop %v1774
      %v1776 = vmul.f32 %v1680, 1.442695
      %v1777 = vpow.pop %v1776
      %v1778 = vmul.f32 %v1682, 1.442695
      %v1779 = vpow.pop %v1778
      %v1780 = vmul.f32 %v1684, 1.442695
      %v1781 = vpow.pop %v1780
      %v1782 = vmul.f32 %v1686, 1.442695
      %v1783 = vpow.pop %v1782
      %v1784 = vsub.f32 %v1721, 1.0
      %v1785 = vsub.f32 %v1723, 1.0
      %v1786 = vsub.f32 %v1725, 1.0
      %v1787 = vsub.f32 %v1727, 1.0
      %v1788 = vsub.f32 %v1729, 1.0
      %v1789 = vsub.f32 %v1731, 1.0
      %v1790 = vsub.f32 %v1733, 1.0
      %v1791 = vsub.f32 %v1735, 1.0
      %v1792 = vsub.f32 %v1737, 1.0
      %v1793 = vsub.f32 %v1739, 1.0
      %v1794 = vsub.f32 %v1741, 1.0
      %v1795 = vsub.f32 %v1743, 1.0
      %v1796 = vsub.f32 %v1745, 1.0
      %v1797 = vsub.f32 %v1747, 1.0
      %v1798 = vsub.f32 %v1749, 1.0
      %v1799 = vsub.f32 %v1751, 1.0
      %v1800 = vsub.f32 %v1753, 1.0
      %v1801 = vsub.f32 %v1755, 1.0
      %v1802 = vsub.f32 %v1757, 1.0
      %v1803 = vsub.f32 %v1759, 1.0
      %v1804 = vsub.f32 %v1761, 1.0
      %v1805 = vsub.f32 %v1763, 1.0
      %v1806 = vsub.f32 %v1765, 1.0
      %v1807 = vsub.f32 %v1767, 1.0
      %v1808 = vsub.f32 %v1769, 1.0
      %v1809 = vsub.f32 %v1771, 1.0
      %v1810 = vsub.f32 %v1773, 1.0
      %v1811 = vsub.f32 %v1775, 1.0
      %v1812 = vsub.f32 %v1777, 1.0
      %v1813 = vsub.f32 %v1779, 1.0
      %v1814 = vsub.f32 %v1781, 1.0
      %v1815 = vsub.f32 %v1783, 1.0
      %v1816 = vsel %vm1688, %v1610, %v1784
      %v1817 = vsel %vm1689, %v1612, %v1785
      %v1818 = vsel %vm1690, %v1614, %v1786
      %v1819 = vsel %vm1691, %v1616, %v1787
      %v1820 = vsel %vm1692, %v1620, %v1788
      %v1821 = vsel %vm1693, %v1622, %v1789
      %v1822 = vsel %vm1694, %v1624, %v1790
      %v1823 = vsel %vm1695, %v1626, %v1791
      %v1824 = vsel %vm1696, %v1630, %v1792
      %v1825 = vsel %vm1697, %v1632, %v1793
      %v1826 = vsel %vm1698, %v1634, %v1794
      %v1827 = vsel %vm1699, %v1636, %v1795
      %v1828 = vsel %vm1700, %v1640, %v1796
      %v1829 = vsel %vm1701, %v1642, %v1797
      %v1830 = vsel %vm1702, %v1644, %v1798
      %v1831 = vsel %vm1703, %v1646, %v1799
      %v1832 = vsel %vm1704, %v1650, %v1800
      %v1833 = vsel %vm1705, %v1652, %v1801
      %v1834 = vsel %vm1706, %v1654, %v1802
      %v1835 = vsel %vm1707, %v1656, %v1803
      %v1836 = vsel %vm1708, %v1660, %v1804
      %v1837 = vsel %vm1709, %v1662, %v1805
      %v1838 = vsel %vm1710, %v1664, %v1806
      %v1839 = vsel %vm1711, %v1666, %v1807
      %v1840 = vsel %vm1712, %v1670, %v1808
      %v1841 = vsel %vm1713, %v1672, %v1809
      %v1842 = vsel %vm1714, %v1674, %v1810
      %v1843 = vsel %vm1715, %v1676, %v1811
      %v1844 = vsel %vm1716, %v1680, %v1812
      %v1845 = vsel %vm1717, %v1682, %v1813
      %v1846 = vsel %vm1718, %v1684, %v1814
      %v1847 = vsel %vm1719, %v1686, %v1815
      %v1848 = vpack.c.bf16 %v1818, %v1816
      %v1849 = vpack.c.bf16 %v1819, %v1817
      %v1850 = vpack.c.bf16 %v1822, %v1820
      %v1851 = vpack.c.bf16 %v1823, %v1821
      %v1852 = vpack.c.bf16 %v1826, %v1824
      %v1853 = vpack.c.bf16 %v1827, %v1825
      %v1854 = vpack.c.bf16 %v1830, %v1828
      %v1855 = vpack.c.bf16 %v1831, %v1829
      %v1856 = vpack.c.bf16 %v1834, %v1832
      %v1857 = vpack.c.bf16 %v1835, %v1833
      %v1858 = vpack.c.bf16 %v1838, %v1836
      %v1859 = vpack.c.bf16 %v1839, %v1837
      %v1860 = vpack.c.bf16 %v1842, %v1840
      %v1861 = vpack.c.bf16 %v1843, %v1841
      %v1862 = vpack.c.bf16 %v1846, %v1844
      %v1863 = vpack.c.bf16 %v1847, %v1845
      %v1864 = vld [vmem:[%s5] sm:$0xff]
      %v1865 = vld [vmem:[%s5 + $0x8] sm:$0xff]
      %v1866 = vld [vmem:[%s5 + $0x10] sm:$0xff]
      %v1867 = vld [vmem:[%s5 + $0x18] sm:$0xff]
      %v1868 = vld [vmem:[%s5 + $0x20] sm:$0xff]
      %v1869 = vld [vmem:[%s5 + $0x28] sm:$0xff]
      %v1870 = vld [vmem:[%s5 + $0x30] sm:$0xff]
      %v1871 = vld [vmem:[%s5 + $0x38] sm:$0xff]
      %v1872 = vld [vmem:[%s5 + $0x40] sm:$0xff]
      %v1873 = vld [vmem:[%s5 + $0x48] sm:$0xff]
      %v1874 = vld [vmem:[%s5 + $0x50] sm:$0xff]
      %v1875 = vld [vmem:[%s5 + $0x58] sm:$0xff]
      %v1876 = vld [vmem:[%s5 + $0x60] sm:$0xff]
      %v1877 = vld [vmem:[%s5 + $0x68] sm:$0xff]
      %v1878 = vld [vmem:[%s5 + $0x70] sm:$0xff]
      %v1879 = vld [vmem:[%s5 + $0x78] sm:$0xff]
      %v1880 = vld [vmem:[%s5 + $0x80] sm:$0xff]
      %v1881 = vld [vmem:[%s5 + $0x88] sm:$0xff]
      %v1882 = vld [vmem:[%s5 + $0x90] sm:$0xff]
      %v1883 = vld [vmem:[%s5 + $0x98] sm:$0xff]
      %v1884 = vld [vmem:[%s5 + $0xa0] sm:$0xff]
      %v1885 = vld [vmem:[%s5 + $0xa8] sm:$0xff]
      %v1886 = vld [vmem:[%s5 + $0xb0] sm:$0xff]
      %v1887 = vld [vmem:[%s5 + $0xb8] sm:$0xff]
      %v1888 = vld [vmem:[%s5 + $0xc0] sm:$0xff]
      %v1889 = vld [vmem:[%s5 + $0xc8] sm:$0xff]
      %v1890 = vld [vmem:[%s5 + $0xd0] sm:$0xff]
      %v1891 = vld [vmem:[%s5 + $0xd8] sm:$0xff]
      %v1892 = vld [vmem:[%s5 + $0xe0] sm:$0xff]
      %v1893 = vld [vmem:[%s5 + $0xe8] sm:$0xff]
      %v1894 = vld [vmem:[%s5 + $0xf0] sm:$0xff]
      %v1895 = vld [vmem:[%s5 + $0xf8] sm:$0xff]
      %v1896 = vld [vmem:[%s6] sm:$0x3]
      %v1898 = vlaneseq
      %v1899 = vshrl.u32 %v1898, 7
      %v1900 = vsub.s32 0, %v1899
      %v1901 = vrot.slane %v1896, %v1900
      %v1902 = vlaneseq
      %v1903 = vshrl.u32 %v1902, 7
      %v1904 = vsub.s32 1, %v1903
      %v1905 = vrot.slane %v1896, %v1904
      %v1940 = vunpack.c.l.b16 %v1864
      %v1941 = vunpack.c.h.b16 %v1864
      %v1942 = vunpack.c.l.b16 %v1865
      %v1943 = vunpack.c.h.b16 %v1865
      %v1944 = vunpack.c.l.b16 %v1866
      %v1945 = vunpack.c.h.b16 %v1866
      %v1946 = vunpack.c.l.b16 %v1867
      %v1947 = vunpack.c.h.b16 %v1867
      %v1948 = vunpack.c.l.b16 %v1868
      %v1949 = vunpack.c.h.b16 %v1868
      %v1950 = vunpack.c.l.b16 %v1869
      %v1951 = vunpack.c.h.b16 %v1869
      %v1952 = vunpack.c.l.b16 %v1870
      %v1953 = vunpack.c.h.b16 %v1870
      %v1954 = vunpack.c.l.b16 %v1871
      %v1955 = vunpack.c.h.b16 %v1871
      %v1956 = vunpack.c.l.b16 %v1872
      %v1957 = vunpack.c.h.b16 %v1872
      %v1958 = vunpack.c.l.b16 %v1873
      %v1959 = vunpack.c.h.b16 %v1873
      %v1960 = vunpack.c.l.b16 %v1874
      %v1961 = vunpack.c.h.b16 %v1874
      %v1962 = vunpack.c.l.b16 %v1875
      %v1963 = vunpack.c.h.b16 %v1875
      %v1964 = vunpack.c.l.b16 %v1876
      %v1965 = vunpack.c.h.b16 %v1876
      %v1966 = vunpack.c.l.b16 %v1877
      %v1967 = vunpack.c.h.b16 %v1877
      %v1968 = vunpack.c.l.b16 %v1878
      %v1969 = vunpack.c.h.b16 %v1878
      %v1970 = vunpack.c.l.b16 %v1879
      %v1971 = vunpack.c.h.b16 %v1879
      %v1972 = vunpack.c.l.b16 %v1880
      %v1973 = vunpack.c.h.b16 %v1880
      %v1974 = vunpack.c.l.b16 %v1881
      %v1975 = vunpack.c.h.b16 %v1881
      %v1976 = vunpack.c.l.b16 %v1882
      %v1977 = vunpack.c.h.b16 %v1882
      %v1978 = vunpack.c.l.b16 %v1883
      %v1979 = vunpack.c.h.b16 %v1883
      %v1980 = vunpack.c.l.b16 %v1884
      %v1981 = vunpack.c.h.b16 %v1884
      %v1982 = vunpack.c.l.b16 %v1885
      %v1983 = vunpack.c.h.b16 %v1885
      %v1984 = vunpack.c.l.b16 %v1886
      %v1985 = vunpack.c.h.b16 %v1886
      %v1986 = vunpack.c.l.b16 %v1887
      %v1987 = vunpack.c.h.b16 %v1887
      %v1988 = vunpack.c.l.b16 %v1888
      %v1989 = vunpack.c.h.b16 %v1888
      %v1990 = vunpack.c.l.b16 %v1889
      %v1991 = vunpack.c.h.b16 %v1889
      %v1992 = vunpack.c.l.b16 %v1890
      %v1993 = vunpack.c.h.b16 %v1890
      %v1994 = vunpack.c.l.b16 %v1891
      %v1995 = vunpack.c.h.b16 %v1891
      %v1996 = vunpack.c.l.b16 %v1892
      %v1997 = vunpack.c.h.b16 %v1892
      %v1998 = vunpack.c.l.b16 %v1893
      %v1999 = vunpack.c.h.b16 %v1893
      %v2000 = vunpack.c.l.b16 %v1894
      %v2001 = vunpack.c.h.b16 %v1894
      %v2002 = vunpack.c.l.b16 %v1895
      %v2003 = vunpack.c.h.b16 %v1895
      %v2004 = vpack.c.b16 %v1942, %v1940
      %v2005 = vpack.c.b16 %v1943, %v1941
      %v2006 = vpack.c.b16 %v1946, %v1944
      %v2007 = vpack.c.b16 %v1947, %v1945
      %v2008 = vpack.c.b16 %v1950, %v1948
      %v2009 = vpack.c.b16 %v1951, %v1949
      %v2010 = vpack.c.b16 %v1954, %v1952
      %v2011 = vpack.c.b16 %v1955, %v1953
      %v2012 = vpack.c.b16 %v1958, %v1956
      %v2013 = vpack.c.b16 %v1959, %v1957
      %v2014 = vpack.c.b16 %v1962, %v1960
      %v2015 = vpack.c.b16 %v1963, %v1961
      %v2016 = vpack.c.b16 %v1966, %v1964
      %v2017 = vpack.c.b16 %v1967, %v1965
      %v2018 = vpack.c.b16 %v1970, %v1968
      %v2019 = vpack.c.b16 %v1971, %v1969
      %v2020 = vpack.c.b16 %v1974, %v1972
      %v2021 = vpack.c.b16 %v1975, %v1973
      %v2022 = vpack.c.b16 %v1978, %v1976
      %v2023 = vpack.c.b16 %v1979, %v1977
      %v2024 = vpack.c.b16 %v1982, %v1980
      %v2025 = vpack.c.b16 %v1983, %v1981
      %v2026 = vpack.c.b16 %v1986, %v1984
      %v2027 = vpack.c.b16 %v1987, %v1985
      %v2028 = vpack.c.b16 %v1990, %v1988
      %v2029 = vpack.c.b16 %v1991, %v1989
      %v2030 = vpack.c.b16 %v1994, %v1992
      %v2031 = vpack.c.b16 %v1995, %v1993
      %v2032 = vpack.c.b16 %v1998, %v1996
      %v2033 = vpack.c.b16 %v1999, %v1997
      %v2034 = vpack.c.b16 %v2002, %v2000
      %v2035 = vpack.c.b16 %v2003, %v2001
      %2068 = vmatprep.subr.bf16.mxu0 %v2019
      %2069 = vmatpush1.bf16.msra.mxu0 %v2018
      %2070 = vmatprep.subr.bf16.mxu0 %v2017
      %2071 = vmatpush1.bf16.msra.mxu0 %v2016
      %2072 = vmatprep.subr.bf16.mxu0 %v2015
      %2073 = vmatpush1.bf16.msra.mxu0 %v2014
      %2074 = vmatprep.subr.bf16.mxu0 %v2013
      %2075 = vmatpush1.bf16.msra.mxu0 %v2012
      %2076 = vmatprep.subr.bf16.mxu0 %v2011
      %2077 = vmatpush1.bf16.msra.mxu0 %v2010
      %2078 = vmatprep.subr.bf16.mxu0 %v2009
      %2079 = vmatpush1.bf16.msra.mxu0 %v2008
      %2080 = vmatprep.subr.bf16.mxu0 %v2007
      %2081 = vmatpush1.bf16.msra.mxu0 %v2006
      %2082 = vmatprep.subr.bf16.mxu0 %v2005
      %2083 = vmatpush1.bf16.msra.mxu0 %v2004
      %2084 = vmatprep.subr.bf16.mxu0 %v2035
      %2085 = vmatpush2.bf16.msra.mxu0 %v2034
      %2086 = vmatprep.subr.bf16.mxu0 %v2033
      %2087 = vmatpush2.bf16.msra.mxu0 %v2032
      %2088 = vmatprep.subr.bf16.mxu0 %v2031
      %2089 = vmatpush2.bf16.msra.mxu0 %v2030
      %2090 = vmatprep.subr.bf16.mxu0 %v2029
      %2091 = vmatpush2.bf16.msra.mxu0 %v2028
      %2092 = vmatprep.subr.bf16.mxu0 %v2027
      %2093 = vmatpush2.bf16.msra.mxu0 %v2026
      %2094 = vmatprep.subr.bf16.mxu0 %v2025
      %2095 = vmatpush2.bf16.msra.mxu0 %v2024
      %2096 = vmatprep.subr.bf16.mxu0 %v2023
      %2097 = vmatpush2.bf16.msra.mxu0 %v2022
      %2098 = vmatprep.subr.bf16.mxu0 %v2021
      %2099 = vmatpush2.bf16.msra.mxu0 %v2020
      %2100 = vmatprep.mubr.bf16.mxu0 %v1849
      %2101 = vmatmul.mubr.bf16.gmra.mxu0 %v1848
      %v2102 = vpop.f32.mrf.mxu0
      %v2103 = vadd.f32 %v1901, %v2102
      %v2104 = vpop.f32.mrf.mxu0
      %v2105 = vadd.f32 %v1905, %v2104
      %v2106 = vpop.f32.mrf.mxu0
      %v2107 = vadd.f32 %v1901, %v2106
      %v2108 = vpop.f32.mrf.mxu0
      %v2109 = vadd.f32 %v1905, %v2108
      %2110 = vmatprep.mubr.bf16.mxu0 %v1851
      %2111 = vmatmul.mubr.bf16.gmra.mxu0 %v1850
      %v2112 = vpop.f32.mrf.mxu0
      %v2113 = vadd.f32 %v1901, %v2112
      %v2114 = vpop.f32.mrf.mxu0
      %v2115 = vadd.f32 %v1905, %v2114
      %v2116 = vpop.f32.mrf.mxu0
      %v2117 = vadd.f32 %v1901, %v2116
      %v2118 = vpop.f32.mrf.mxu0
      %v2119 = vadd.f32 %v1905, %v2118
      %2120 = vmatprep.mubr.bf16.mxu0 %v1853
      %2121 = vmatmul.mubr.bf16.gmra.mxu0 %v1852
      %v2122 = vpop.f32.mrf.mxu0
      %v2123 = vadd.f32 %v1901, %v2122
      %v2124 = vpop.f32.mrf.mxu0
      %v2125 = vadd.f32 %v1905, %v2124
      %v2126 = vpop.f32.mrf.mxu0
      %v2127 = vadd.f32 %v1901, %v2126
      %v2128 = vpop.f32.mrf.mxu0
      %v2129 = vadd.f32 %v1905, %v2128
      %2130 = vmatprep.mubr.bf16.mxu0 %v1855
      %2131 = vmatmul.mubr.bf16.gmra.mxu0 %v1854
      %v2132 = vpop.f32.mrf.mxu0
      %v2133 = vadd.f32 %v1901, %v2132
      %v2134 = vpop.f32.mrf.mxu0
      %v2135 = vadd.f32 %v1905, %v2134
      %v2136 = vpop.f32.mrf.mxu0
      %v2137 = vadd.f32 %v1901, %v2136
      %v2138 = vpop.f32.mrf.mxu0
      %v2139 = vadd.f32 %v1905, %v2138
      %2140 = vmatprep.mubr.bf16.mxu0 %v1857
      %2141 = vmatmul.mubr.bf16.gmra.mxu0 %v1856
      %v2142 = vpop.f32.mrf.mxu0
      %v2143 = vadd.f32 %v1901, %v2142
      %v2144 = vpop.f32.mrf.mxu0
      %v2145 = vadd.f32 %v1905, %v2144
      %v2146 = vpop.f32.mrf.mxu0
      %v2147 = vadd.f32 %v1901, %v2146
      %v2148 = vpop.f32.mrf.mxu0
      %v2149 = vadd.f32 %v1905, %v2148
      %2150 = vmatprep.mubr.bf16.mxu0 %v1859
      %2151 = vmatmul.mubr.bf16.gmra.mxu0 %v1858
      %v2152 = vpop.f32.mrf.mxu0
      %v2153 = vadd.f32 %v1901, %v2152
      %v2154 = vpop.f32.mrf.mxu0
      %v2155 = vadd.f32 %v1905, %v2154
      %v2156 = vpop.f32.mrf.mxu0
      %v2157 = vadd.f32 %v1901, %v2156
      %v2158 = vpop.f32.mrf.mxu0
      %v2159 = vadd.f32 %v1905, %v2158
      %2160 = vmatprep.mubr.bf16.mxu0 %v1861
      %2161 = vmatmul.mubr.bf16.gmra.mxu0 %v1860
      %v2162 = vpop.f32.mrf.mxu0
      %v2163 = vadd.f32 %v1901, %v2162
      %v2164 = vpop.f32.mrf.mxu0
      %v2165 = vadd.f32 %v1905, %v2164
      %v2166 = vpop.f32.mrf.mxu0
      %v2167 = vadd.f32 %v1901, %v2166
      %v2168 = vpop.f32.mrf.mxu0
      %v2169 = vadd.f32 %v1905, %v2168
      %2170 = vmatprep.mubr.bf16.mxu0 %v1863
      %2171 = vmatmul.mubr.bf16.gmra.mxu0 %v1862
      %v2172 = vpop.f32.mrf.mxu0
      %v2173 = vadd.f32 %v1901, %v2172
      %v2174 = vpop.f32.mrf.mxu0
      %v2175 = vadd.f32 %v1905, %v2174
      %v2176 = vpop.f32.mrf.mxu0
      %v2177 = vadd.f32 %v1901, %v2176
      %v2178 = vpop.f32.mrf.mxu0
      %v2179 = vadd.f32 %v1905, %v2178
      %2180 = vdwg.mxu0
      %vm2181 = vcmp.gt.f32.partialorder %v2103, 0.0
      %vm2182 = vcmp.gt.f32.partialorder %v2105, 0.0
      %vm2183 = vcmp.gt.f32.partialorder %v2107, 0.0
      %vm2184 = vcmp.gt.f32.partialorder %v2109, 0.0
      %vm2185 = vcmp.gt.f32.partialorder %v2113, 0.0
      %vm2186 = vcmp.gt.f32.partialorder %v2115, 0.0
      %vm2187 = vcmp.gt.f32.partialorder %v2117, 0.0
      %vm2188 = vcmp.gt.f32.partialorder %v2119, 0.0
      %vm2189 = vcmp.gt.f32.partialorder %v2123, 0.0
      %vm2190 = vcmp.gt.f32.partialorder %v2125, 0.0
      %vm2191 = vcmp.gt.f32.partialorder %v2127, 0.0
      %vm2192 = vcmp.gt.f32.partialorder %v2129, 0.0
      %vm2193 = vcmp.gt.f32.partialorder %v2133, 0.0
      %vm2194 = vcmp.gt.f32.partialorder %v2135, 0.0
      %vm2195 = vcmp.gt.f32.partialorder %v2137, 0.0
      %vm2196 = vcmp.gt.f32.partialorder %v2139, 0.0
      %vm2197 = vcmp.gt.f32.partialorder %v2143, 0.0
      %vm2198 = vcmp.gt.f32.partialorder %v2145, 0.0
      %vm2199 = vcmp.gt.f32.partialorder %v2147, 0.0
      %vm2200 = vcmp.gt.f32.partialorder %v2149, 0.0
      %vm2201 = vcmp.gt.f32.partialorder %v2153, 0.0
      %vm2202 = vcmp.gt.f32.partialorder %v2155, 0.0
      %vm2203 = vcmp.gt.f32.partialorder %v2157, 0.0
      %vm2204 = vcmp.gt.f32.partialorder %v2159, 0.0
      %vm2205 = vcmp.gt.f32.partialorder %v2163, 0.0
      %vm2206 = vcmp.gt.f32.partialorder %v2165, 0.0
      %vm2207 = vcmp.gt.f32.partialorder %v2167, 0.0
      %vm2208 = vcmp.gt.f32.partialorder %v2169, 0.0
      %vm2209 = vcmp.gt.f32.partialorder %v2173, 0.0
      %vm2210 = vcmp.gt.f32.partialorder %v2175, 0.0
      %vm2211 = vcmp.gt.f32.partialorder %v2177, 0.0
      %vm2212 = vcmp.gt.f32.partialorder %v2179, 0.0
      %v2213 = vmul.f32 %v2103, 1.442695
      %v2214 = vpow.pop %v2213
      %v2215 = vmul.f32 %v2105, 1.442695
      %v2216 = vpow.pop %v2215
      %v2217 = vmul.f32 %v2107, 1.442695
      %v2218 = vpow.pop %v2217
      %v2219 = vmul.f32 %v2109, 1.442695
      %v2220 = vpow.pop %v2219
      %v2221 = vmul.f32 %v2113, 1.442695
      %v2222 = vpow.pop %v2221
      %v2223 = vmul.f32 %v2115, 1.442695
      %v2224 = vpow.pop %v2223
      %v2225 = vmul.f32 %v2117, 1.442695
      %v2226 = vpow.pop %v2225
      %v2227 = vmul.f32 %v2119, 1.442695
      %v2228 = vpow.pop %v2227
      %v2229 = vmul.f32 %v2123, 1.442695
      %v2230 = vpow.pop %v2229
      %v2231 = vmul.f32 %v2125, 1.442695
      %v2232 = vpow.pop %v2231
      %v2233 = vmul.f32 %v2127, 1.442695
      %v2234 = vpow.pop %v2233
      %v2235 = vmul.f32 %v2129, 1.442695
      %v2236 = vpow.pop %v2235
      %v2237 = vmul.f32 %v2133, 1.442695
      %v2238 = vpow.pop %v2237
      %v2239 = vmul.f32 %v2135, 1.442695
      %v2240 = vpow.pop %v2239
      %v2241 = vmul.f32 %v2137, 1.442695
      %v2242 = vpow.pop %v2241
      %v2243 = vmul.f32 %v2139, 1.442695
      %v2244 = vpow.pop %v2243
      %v2245 = vmul.f32 %v2143, 1.442695
      %v2246 = vpow.pop %v2245
      %v2247 = vmul.f32 %v2145, 1.442695
      %v2248 = vpow.pop %v2247
      %v2249 = vmul.f32 %v2147, 1.442695
      %v2250 = vpow.pop %v2249
      %v2251 = vmul.f32 %v2149, 1.442695
      %v2252 = vpow.pop %v2251
      %v2253 = vmul.f32 %v2153, 1.442695
      %v2254 = vpow.pop %v2253
      %v2255 = vmul.f32 %v2155, 1.442695
      %v2256 = vpow.pop %v2255
      %v2257 = vmul.f32 %v2157, 1.442695
      %v2258 = vpow.pop %v2257
      %v2259 = vmul.f32 %v2159, 1.442695
      %v2260 = vpow.pop %v2259
      %v2261 = vmul.f32 %v2163, 1.442695
      %v2262 = vpow.pop %v2261
      %v2263 = vmul.f32 %v2165, 1.442695
      %v2264 = vpow.pop %v2263
      %v2265 = vmul.f32 %v2167, 1.442695
      %v2266 = vpow.pop %v2265
      %v2267 = vmul.f32 %v2169, 1.442695
      %v2268 = vpow.pop %v2267
      %v2269 = vmul.f32 %v2173, 1.442695
      %v2270 = vpow.pop %v2269
      %v2271 = vmul.f32 %v2175, 1.442695
      %v2272 = vpow.pop %v2271
      %v2273 = vmul.f32 %v2177, 1.442695
      %v2274 = vpow.pop %v2273
      %v2275 = vmul.f32 %v2179, 1.442695
      %v2276 = vpow.pop %v2275
      %v2277 = vsub.f32 %v2214, 1.0
      %v2278 = vsub.f32 %v2216, 1.0
      %v2279 = vsub.f32 %v2218, 1.0
      %v2280 = vsub.f32 %v2220, 1.0
      %v2281 = vsub.f32 %v2222, 1.0
      %v2282 = vsub.f32 %v2224, 1.0
      %v2283 = vsub.f32 %v2226, 1.0
      %v2284 = vsub.f32 %v2228, 1.0
      %v2285 = vsub.f32 %v2230, 1.0
      %v2286 = vsub.f32 %v2232, 1.0
      %v2287 = vsub.f32 %v2234, 1.0
      %v2288 = vsub.f32 %v2236, 1.0
      %v2289 = vsub.f32 %v2238, 1.0
      %v2290 = vsub.f32 %v2240, 1.0
      %v2291 = vsub.f32 %v2242, 1.0
      %v2292 = vsub.f32 %v2244, 1.0
      %v2293 = vsub.f32 %v2246, 1.0
      %v2294 = vsub.f32 %v2248, 1.0
      %v2295 = vsub.f32 %v2250, 1.0
      %v2296 = vsub.f32 %v2252, 1.0
      %v2297 = vsub.f32 %v2254, 1.0
      %v2298 = vsub.f32 %v2256, 1.0
      %v2299 = vsub.f32 %v2258, 1.0
      %v2300 = vsub.f32 %v2260, 1.0
      %v2301 = vsub.f32 %v2262, 1.0
      %v2302 = vsub.f32 %v2264, 1.0
      %v2303 = vsub.f32 %v2266, 1.0
      %v2304 = vsub.f32 %v2268, 1.0
      %v2305 = vsub.f32 %v2270, 1.0
      %v2306 = vsub.f32 %v2272, 1.0
      %v2307 = vsub.f32 %v2274, 1.0
      %v2308 = vsub.f32 %v2276, 1.0
      %v2309 = vsel %vm2181, %v2103, %v2277
      %v2310 = vsel %vm2182, %v2105, %v2278
      %v2311 = vsel %vm2183, %v2107, %v2279
      %v2312 = vsel %vm2184, %v2109, %v2280
      %v2313 = vsel %vm2185, %v2113, %v2281
      %v2314 = vsel %vm2186, %v2115, %v2282
      %v2315 = vsel %vm2187, %v2117, %v2283
      %v2316 = vsel %vm2188, %v2119, %v2284
      %v2317 = vsel %vm2189, %v2123, %v2285
      %v2318 = vsel %vm2190, %v2125, %v2286
      %v2319 = vsel %vm2191, %v2127, %v2287
      %v2320 = vsel %vm2192, %v2129, %v2288
      %v2321 = vsel %vm2193, %v2133, %v2289
      %v2322 = vsel %vm2194, %v2135, %v2290
      %v2323 = vsel %vm2195, %v2137, %v2291
      %v2324 = vsel %vm2196, %v2139, %v2292
      %v2325 = vsel %vm2197, %v2143, %v2293
      %v2326 = vsel %vm2198, %v2145, %v2294
      %v2327 = vsel %vm2199, %v2147, %v2295
      %v2328 = vsel %vm2200, %v2149, %v2296
      %v2329 = vsel %vm2201, %v2153, %v2297
      %v2330 = vsel %vm2202, %v2155, %v2298
      %v2331 = vsel %vm2203, %v2157, %v2299
      %v2332 = vsel %vm2204, %v2159, %v2300
      %v2333 = vsel %vm2205, %v2163, %v2301
      %v2334 = vsel %vm2206, %v2165, %v2302
      %v2335 = vsel %vm2207, %v2167, %v2303
      %v2336 = vsel %vm2208, %v2169, %v2304
      %v2337 = vsel %vm2209, %v2173, %v2305
      %v2338 = vsel %vm2210, %v2175, %v2306
      %v2339 = vsel %vm2211, %v2177, %v2307
      %v2340 = vsel %vm2212, %v2179, %v2308
      %v2341 = vpack.c.bf16 %v2311, %v2309
      %v2342 = vpack.c.bf16 %v2312, %v2310
      %v2343 = vpack.c.bf16 %v2315, %v2313
      %v2344 = vpack.c.bf16 %v2316, %v2314
      %v2345 = vpack.c.bf16 %v2319, %v2317
      %v2346 = vpack.c.bf16 %v2320, %v2318
      %v2347 = vpack.c.bf16 %v2323, %v2321
      %v2348 = vpack.c.bf16 %v2324, %v2322
      %v2349 = vpack.c.bf16 %v2327, %v2325
      %v2350 = vpack.c.bf16 %v2328, %v2326
      %v2351 = vpack.c.bf16 %v2331, %v2329
      %v2352 = vpack.c.bf16 %v2332, %v2330
      %v2353 = vpack.c.bf16 %v2335, %v2333
      %v2354 = vpack.c.bf16 %v2336, %v2334
      %v2355 = vpack.c.bf16 %v2339, %v2337
      %v2356 = vpack.c.bf16 %v2340, %v2338
      %v2357 = vld [vmem:[%s7] sm:$0xf]
      %v2358 = vld [vmem:[%s7 + $0x4] sm:$0xf]
      %v2359 = vld [vmem:[%s7 + $0x8] sm:$0xf]
      %v2360 = vld [vmem:[%s7 + $0xc] sm:$0xf]
      %v2361 = vld [vmem:[%s7 + $0x10] sm:$0xf]
      %v2362 = vld [vmem:[%s7 + $0x14] sm:$0xf]
      %v2363 = vld [vmem:[%s7 + $0x18] sm:$0xf]
      %v2364 = vld [vmem:[%s7 + $0x1c] sm:$0xf]
      %v2365 = vld [vmem:[%s7 + $0x20] sm:$0xf]
      %v2366 = vld [vmem:[%s7 + $0x24] sm:$0xf]
      %v2367 = vld [vmem:[%s7 + $0x28] sm:$0xf]
      %v2368 = vld [vmem:[%s7 + $0x2c] sm:$0xf]
      %v2369 = vld [vmem:[%s7 + $0x30] sm:$0xf]
      %v2370 = vld [vmem:[%s7 + $0x34] sm:$0xf]
      %v2371 = vld [vmem:[%s7 + $0x38] sm:$0xf]
      %v2372 = vld [vmem:[%s7 + $0x3c] sm:$0xf]
      %v2373 = vld [vmem:[%s7 + $0x40] sm:$0xf]
      %v2374 = vld [vmem:[%s7 + $0x44] sm:$0xf]
      %v2375 = vld [vmem:[%s7 + $0x48] sm:$0xf]
      %v2376 = vld [vmem:[%s7 + $0x4c] sm:$0xf]
      %v2377 = vld [vmem:[%s7 + $0x50] sm:$0xf]
      %v2378 = vld [vmem:[%s7 + $0x54] sm:$0xf]
      %v2379 = vld [vmem:[%s7 + $0x58] sm:$0xf]
      %v2380 = vld [vmem:[%s7 + $0x5c] sm:$0xf]
      %v2381 = vld [vmem:[%s7 + $0x60] sm:$0xf]
      %v2382 = vld [vmem:[%s7 + $0x64] sm:$0xf]
      %v2383 = vld [vmem:[%s7 + $0x68] sm:$0xf]
      %v2384 = vld [vmem:[%s7 + $0x6c] sm:$0xf]
      %v2385 = vld [vmem:[%s7 + $0x70] sm:$0xf]
      %v2386 = vld [vmem:[%s7 + $0x74] sm:$0xf]
      %v2387 = vld [vmem:[%s7 + $0x78] sm:$0xf]
      %v2388 = vld [vmem:[%s7 + $0x7c] sm:$0xf]
      %v2389 = vld [vmem:[%s8] sm:$0x1]
      %v2391 = vlaneseq
      %v2392 = vshrl.u32 %v2391, 7
      %v2393 = vsub.s32 0, %v2392
      %v2394 = vrot.slane %v2389, %v2393
      %v2428 = vunpack.c.l.b16 %v2357
      %v2429 = vunpack.c.l.b16 %v2358
      %v2430 = vunpack.c.l.b16 %v2359
      %v2431 = vunpack.c.l.b16 %v2360
      %v2432 = vunpack.c.l.b16 %v2361
      %v2433 = vunpack.c.l.b16 %v2362
      %v2434 = vunpack.c.l.b16 %v2363
      %v2435 = vunpack.c.l.b16 %v2364
      %v2436 = vunpack.c.l.b16 %v2365
      %v2437 = vunpack.c.l.b16 %v2366
      %v2438 = vunpack.c.l.b16 %v2367
      %v2439 = vunpack.c.l.b16 %v2368
      %v2440 = vunpack.c.l.b16 %v2369
      %v2441 = vunpack.c.l.b16 %v2370
      %v2442 = vunpack.c.l.b16 %v2371
      %v2443 = vunpack.c.l.b16 %v2372
      %v2444 = vunpack.c.l.b16 %v2373
      %v2445 = vunpack.c.l.b16 %v2374
      %v2446 = vunpack.c.l.b16 %v2375
      %v2447 = vunpack.c.l.b16 %v2376
      %v2448 = vunpack.c.l.b16 %v2377
      %v2449 = vunpack.c.l.b16 %v2378
      %v2450 = vunpack.c.l.b16 %v2379
      %v2451 = vunpack.c.l.b16 %v2380
      %v2452 = vunpack.c.l.b16 %v2381
      %v2453 = vunpack.c.l.b16 %v2382
      %v2454 = vunpack.c.l.b16 %v2383
      %v2455 = vunpack.c.l.b16 %v2384
      %v2456 = vunpack.c.l.b16 %v2385
      %v2457 = vunpack.c.l.b16 %v2386
      %v2458 = vunpack.c.l.b16 %v2387
      %v2459 = vunpack.c.l.b16 %v2388
      %v2460 = vpack.c.b16 %v2429, %v2428
      %v2461 = vpack.c.b16 %v2431, %v2430
      %v2462 = vpack.c.b16 %v2433, %v2432
      %v2463 = vpack.c.b16 %v2435, %v2434
      %v2464 = vpack.c.b16 %v2437, %v2436
      %v2465 = vpack.c.b16 %v2439, %v2438
      %v2466 = vpack.c.b16 %v2441, %v2440
      %v2467 = vpack.c.b16 %v2443, %v2442
      %v2468 = vpack.c.b16 %v2445, %v2444
      %v2469 = vpack.c.b16 %v2447, %v2446
      %v2470 = vpack.c.b16 %v2449, %v2448
      %v2471 = vpack.c.b16 %v2451, %v2450
      %v2472 = vpack.c.b16 %v2453, %v2452
      %v2473 = vpack.c.b16 %v2455, %v2454
      %v2474 = vpack.c.b16 %v2457, %v2456
      %v2475 = vpack.c.b16 %v2459, %v2458
      %2492 = vmatprep.subr.bf16.mxu0 0
      %2493 = vmatpush1.bf16.msra.mxu0 %v2467
      %2494 = vmatprep.subr.bf16.mxu0 0
      %2495 = vmatpush1.bf16.msra.mxu0 %v2466
      %2496 = vmatprep.subr.bf16.mxu0 0
      %2497 = vmatpush1.bf16.msra.mxu0 %v2465
      %2498 = vmatprep.subr.bf16.mxu0 0
      %2499 = vmatpush1.bf16.msra.mxu0 %v2464
      %2500 = vmatprep.subr.bf16.mxu0 0
      %2501 = vmatpush1.bf16.msra.mxu0 %v2463
      %2502 = vmatprep.subr.bf16.mxu0 0
      %2503 = vmatpush1.bf16.msra.mxu0 %v2462
      %2504 = vmatprep.subr.bf16.mxu0 0
      %2505 = vmatpush1.bf16.msra.mxu0 %v2461
      %2506 = vmatprep.subr.bf16.mxu0 0
      %2507 = vmatpush1.bf16.msra.mxu0 %v2460
      %2508 = vmatprep.subr.bf16.mxu0 0
      %2509 = vmatpush2.bf16.msra.mxu0 %v2475
      %2510 = vmatprep.subr.bf16.mxu0 0
      %2511 = vmatpush2.bf16.msra.mxu0 %v2474
      %2512 = vmatprep.subr.bf16.mxu0 0
      %2513 = vmatpush2.bf16.msra.mxu0 %v2473
      %2514 = vmatprep.subr.bf16.mxu0 0
      %2515 = vmatpush2.bf16.msra.mxu0 %v2472
      %2516 = vmatprep.subr.bf16.mxu0 0
      %2517 = vmatpush2.bf16.msra.mxu0 %v2471
      %2518 = vmatprep.subr.bf16.mxu0 0
      %2519 = vmatpush2.bf16.msra.mxu0 %v2470
      %2520 = vmatprep.subr.bf16.mxu0 0
      %2521 = vmatpush2.bf16.msra.mxu0 %v2469
      %2522 = vmatprep.subr.bf16.mxu0 0
      %2523 = vmatpush2.bf16.msra.mxu0 %v2468
      %2524 = vmatprep.mubr.bf16.mxu0 %v2342
      %2525 = vmatmul.mubr.bf16.gmra.mxu0 %v2341
      %v2526 = vpop.f32.mrf.mxu0
      %v2527 = vadd.f32 %v2394, %v2526
      %v2528 = vpop.f32.mrf.mxu0
      %v2529 = vpop.f32.mrf.mxu0
      %v2530 = vadd.f32 %v2394, %v2529
      %v2531 = vpop.f32.mrf.mxu0
      %2532 = vmatprep.mubr.bf16.mxu0 %v2344
      %2533 = vmatmul.mubr.bf16.gmra.mxu0 %v2343
      %v2534 = vpop.f32.mrf.mxu0
      %v2535 = vadd.f32 %v2394, %v2534
      %v2536 = vpop.f32.mrf.mxu0
      %v2537 = vpop.f32.mrf.mxu0
      %v2538 = vadd.f32 %v2394, %v2537
      %v2539 = vpop.f32.mrf.mxu0
      %2540 = vmatprep.mubr.bf16.mxu0 %v2346
      %2541 = vmatmul.mubr.bf16.gmra.mxu0 %v2345
      %v2542 = vpop.f32.mrf.mxu0
      %v2543 = vadd.f32 %v2394, %v2542
      %v2544 = vpop.f32.mrf.mxu0
      %v2545 = vpop.f32.mrf.mxu0
      %v2546 = vadd.f32 %v2394, %v2545
      %v2547 = vpop.f32.mrf.mxu0
      %2548 = vmatprep.mubr.bf16.mxu0 %v2348
      %2549 = vmatmul.mubr.bf16.gmra.mxu0 %v2347
      %v2550 = vpop.f32.mrf.mxu0
      %v2551 = vadd.f32 %v2394, %v2550
      %v2552 = vpop.f32.mrf.mxu0
      %v2553 = vpop.f32.mrf.mxu0
      %v2554 = vadd.f32 %v2394, %v2553
      %v2555 = vpop.f32.mrf.mxu0
      %2556 = vmatprep.mubr.bf16.mxu0 %v2350
      %2557 = vmatmul.mubr.bf16.gmra.mxu0 %v2349
      %v2558 = vpop.f32.mrf.mxu0
      %v2559 = vadd.f32 %v2394, %v2558
      %v2560 = vpop.f32.mrf.mxu0
      %v2561 = vpop.f32.mrf.mxu0
      %v2562 = vadd.f32 %v2394, %v2561
      %v2563 = vpop.f32.mrf.mxu0
      %2564 = vmatprep.mubr.bf16.mxu0 %v2352
      %2565 = vmatmul.mubr.bf16.gmra.mxu0 %v2351
      %v2566 = vpop.f32.mrf.mxu0
      %v2567 = vadd.f32 %v2394, %v2566
      %v2568 = vpop.f32.mrf.mxu0
      %v2569 = vpop.f32.mrf.mxu0
      %v2570 = vadd.f32 %v2394, %v2569
      %v2571 = vpop.f32.mrf.mxu0
      %2572 = vmatprep.mubr.bf16.mxu0 %v2354
      %2573 = vmatmul.mubr.bf16.gmra.mxu0 %v2353
      %v2574 = vpop.f32.mrf.mxu0
      %v2575 = vadd.f32 %v2394, %v2574
      %v2576 = vpop.f32.mrf.mxu0
      %v2577 = vpop.f32.mrf.mxu0
      %v2578 = vadd.f32 %v2394, %v2577
      %v2579 = vpop.f32.mrf.mxu0
      %2580 = vmatprep.mubr.bf16.mxu0 %v2356
      %2581 = vmatmul.mubr.bf16.gmra.mxu0 %v2355
      %v2582 = vpop.f32.mrf.mxu0
      %v2583 = vadd.f32 %v2394, %v2582
      %v2584 = vpop.f32.mrf.mxu0
      %v2585 = vpop.f32.mrf.mxu0
      %v2586 = vadd.f32 %v2394, %v2585
      %v2587 = vpop.f32.mrf.mxu0
      %2588 = vdwg.mxu0
      %v2589 = vtanh.pop %v2527
      %v2590 = vtanh.pop %v2530
      %v2591 = vtanh.pop %v2535
      %v2592 = vtanh.pop %v2538
      %v2593 = vtanh.pop %v2543
      %v2594 = vtanh.pop %v2546
      %v2595 = vtanh.pop %v2551
      %v2596 = vtanh.pop %v2554
      %v2597 = vtanh.pop %v2559
      %v2598 = vtanh.pop %v2562
      %v2599 = vtanh.pop %v2567
      %v2600 = vtanh.pop %v2570
      %v2601 = vtanh.pop %v2575
      %v2602 = vtanh.pop %v2578
      %v2603 = vtanh.pop %v2583
      %v2604 = vtanh.pop %v2586
      %2605 = vst [vmem:[%s334] sm:$0xff] %v2589
      %2606 = vst [vmem:[%s334 + $0x8] sm:$0xff] %v2590
      %2607 = vst [vmem:[%s334 + $0x10] sm:$0xff] %v2591
      %2608 = vst [vmem:[%s334 + $0x18] sm:$0xff] %v2592
      %2609 = vst [vmem:[%s334 + $0x20] sm:$0xff] %v2593
      %2610 = vst [vmem:[%s334 + $0x28] sm:$0xff] %v2594
      %2611 = vst [vmem:[%s334 + $0x30] sm:$0xff] %v2595
      %2612 = vst [vmem:[%s334 + $0x38] sm:$0xff] %v2596
      %2613 = vst [vmem:[%s334 + $0x40] sm:$0xff] %v2597
      %2614 = vst [vmem:[%s334 + $0x48] sm:$0xff] %v2598
      %2615 = vst [vmem:[%s334 + $0x50] sm:$0xff] %v2599
      %2616 = vst [vmem:[%s334 + $0x58] sm:$0xff] %v2600
      %2617 = vst [vmem:[%s334 + $0x60] sm:$0xff] %v2601
      %2618 = vst [vmem:[%s334 + $0x68] sm:$0xff] %v2602
      %2619 = vst [vmem:[%s334 + $0x70] sm:$0xff] %v2603
      %2620 = vst [vmem:[%s334 + $0x78] sm:$0xff] %v2604
      %s2621 = smul.u32 16, %s20
      %p2622 = scmp.lt.s32.totalorder %s2621, 31
      %s2623 = scalar_select %p2622, %s2621, 31
      %s2624 = smul.addr %s2623, 8
      %s2625 = scalar_lea.vmem %s9, %s2624
      // Predicated region
      $region57: #{actor_forward.1} parent=55 // pred_check
        %p2626 = pneg %p232
      $region58: #{actor_forward.1} parent=55 // pred_check_branch
        %2628 = sbr.rel (%p2626) target = $region60
      $region59: #{actor_forward.1} parent=55 // pred_region
        %s2629 = smul.u32 16, %s20
      $region60: #{actor_forward.1} parent=55 // pred_fallthru
        _
    $region56: #{actor_forward.1} parent=5 // pred_fallthru
      _
    %p2630 = scmp.le.s32.totalorder 2, %s15
    // Predicated region
    $region61: #{actor_forward.1} parent=5 // pred_check
      %p2631 = pneg %p2630
    $region62: #{actor_forward.1} parent=5 // pred_check_branch
      %2633 = sbr.rel (%p2631) target = $region64
    $region63: #{actor_forward.1} parent=5 // pred_region
      %s2634 = ssub.s32 %s15, 2
      // Predicated region
      $region65: #{actor_forward.1} parent=63 // pred_check
        %p2635 = pneg %p238
      $region66: #{actor_forward.1} parent=63 // pred_check_branch
        %2637 = sbr.rel (%p2635) target = $region68
      $region67: #{actor_forward.1} parent=63 // pred_region
        %s2638 = smul.u32 16, %s21
        %p2639 = scmp.lt.s32.totalorder %s2638, 31
        %s2640 = scalar_select %p2639, %s2638, 31
        %s2641 = smul.addr %s2640, 8
        %s2642 = scalar_lea.vmem %s9, %s2641
      $region68: #{actor_forward.1} parent=63 // pred_fallthru
        _
    $region64: #{actor_forward.1} parent=5 // pred_fallthru
      _
  $region6: #{actor_forward.1} parent=0 // loop_footer
    %s19 = sadd.s32 1, %s15
  $region7: #{actor_forward.1} parent=0 // loop_footer_branch
    %14 = sbr.rel target = $region3
  $region8: #{actor_forward.1} parent=0 // loop_exit
    _

</llo_original>
